<compile_context>
chip_gen: v6e
topology: v6e:2x2x1
jax: 0.10.0
libtpu: 0.0.40
codegen_flags: <defaults>
</compile_context>

<pallas_src>
import jax
import jax.numpy as jnp
from jax.experimental import pallas as pl
from jax.experimental.pallas import tpu as pltpu


# ----------------------------------------------------------------------------
# Kernels
# ----------------------------------------------------------------------------
def _layer1_kernel(adj_ref, xs_ref, nd_ref, ns_ref, w1_ref, b1_ref, w2_ref,
                   o_ref, acc_ref):
    """o = ns_i * ( ReLU( nd_i * (sum_k A[i,k] @ Xs[k]) @ W1 + b1 ) @ W2 )."""
    k = pl.program_id(1)

    @pl.when(k == 0)
    def _():
        acc_ref[...] = jnp.zeros_like(acc_ref)

    # Inner loop: pure bf16 MXU matmul (Xs already carries D_out^{-1/2}).
    acc_ref[...] += jnp.dot(adj_ref[...], xs_ref[...],
                            preferred_element_type=jnp.float32)

    @pl.when(k == pl.num_programs(1) - 1)
    def _():
        agg = acc_ref[...] * nd_ref[...]                      # D_in^{-1/2}
        h = jnp.maximum(
            jnp.dot(agg, w1_ref[...], preferred_element_type=jnp.float32)
            + b1_ref[...], 0.0)
        # Fused layer-2 projection (A @ (h W2) association) + layer-2 source
        # normalization, so layer 2's inner loop is also a bare matmul.
        o_ref[...] = (
            jnp.dot(h, w2_ref[...], preferred_element_type=jnp.float32)
            * ns_ref[...]).astype(o_ref.dtype)


def _layer2_kernel(adj_ref, hw_ref, nd_ref, b2_ref, o_ref, acc_ref):
    """o = nd_i * sum_k A[i,k] @ HW[k] + b2 (HW already carries ns)."""
    k = pl.program_id(1)

    @pl.when(k == 0)
    def _():
        acc_ref[...] = jnp.zeros_like(acc_ref)

    acc_ref[...] += jnp.dot(adj_ref[...], hw_ref[...],
                            preferred_element_type=jnp.float32)

    @pl.when(k == pl.num_programs(1) - 1)
    def _():
        o_ref[...] = (acc_ref[...] * nd_ref[...] + b2_ref[...]).astype(
            o_ref.dtype)


# ----------------------------------------------------------------------------
# pallas_call wrappers
# ----------------------------------------------------------------------------
def _round_up(x, m):
    return ((x + m - 1) // m) * m


def _pick_tiles(n_pad):
    """dst-row tile (tm) and contraction tile (tk); must divide n_pad."""
    tm = 256 if (n_pad % 256 == 0 and n_pad >= 1024) else 128
    if n_pad % 512 == 0 and n_pad >= 2048:
        tk = 512
    elif n_pad % 256 == 0 and n_pad >= 1024:
        tk = 256
    else:
        tk = 128
    return tm, tk


def _layer1(adj, xs, nd, ns, w1, b1, w2, *, tm, tk):
    n_pad = adj.shape[0]
    fp, hp = w1.shape
    op = w2.shape[1]
    grid = (n_pad // tm, n_pad // tk)
    flops = 2 * n_pad * n_pad * fp + 2 * n_pad * (fp * hp + hp * op)
    bytes_accessed = (n_pad * n_pad * 2 + grid[0] * n_pad * fp * 2
                      + n_pad * op * 2 + (fp * hp + hp * op + hp) * 4)
    return pl.pallas_call(
        _layer1_kernel,
        out_shape=jax.ShapeDtypeStruct((n_pad, op), jnp.bfloat16),
        grid_spec=pltpu.PrefetchScalarGridSpec(
            num_scalar_prefetch=0,
            grid=grid,
            in_specs=[
                pl.BlockSpec((tm, tk), lambda i, k: (i, k)),   # adjacency tile
                pl.BlockSpec((tk, fp), lambda i, k: (k, 0)),   # pre-scaled X
                pl.BlockSpec((tm, 1), lambda i, k: (i, 0)),    # rsqrt(in_deg)
                pl.BlockSpec((tm, 1), lambda i, k: (i, 0)),    # rsqrt(out_deg)
                pl.BlockSpec((fp, hp), lambda i, k: (0, 0)),   # W1
                pl.BlockSpec((1, hp), lambda i, k: (0, 0)),    # b1
                pl.BlockSpec((hp, op), lambda i, k: (0, 0)),   # W2 (fused)
            ],
            out_specs=pl.BlockSpec((tm, op), lambda i, k: (i, 0)),
            scratch_shapes=[pltpu.VMEM((tm, fp), jnp.float32)],
        ),
        compiler_params=pltpu.CompilerParams(
            dimension_semantics=("parallel", "arbitrary")),
        cost_estimate=pl.CostEstimate(
            flops=flops, transcendentals=0, bytes_accessed=bytes_accessed),
    )(adj, xs, nd, ns, w1, b1, w2)


def _layer2(adj, hw, nd, b2, *, tm, tk):
    n_pad = adj.shape[0]
    op = hw.shape[1]
    grid = (n_pad // tm, n_pad // tk)
    flops = 2 * n_pad * n_pad * op
    bytes_accessed = (n_pad * n_pad * 2 + grid[0] * n_pad * op * 2
                      + n_pad * op * 4)
    return pl.pallas_call(
        _layer2_kernel,
        out_shape=jax.ShapeDtypeStruct((n_pad, op), jnp.float32),
        grid_spec=pltpu.PrefetchScalarGridSpec(
            num_scalar_prefetch=0,
            grid=grid,
            in_specs=[
                pl.BlockSpec((tm, tk), lambda i, k: (i, k)),   # adjacency tile
                pl.BlockSpec((tk, op), lambda i, k: (k, 0)),   # ns*(h @ W2)
                pl.BlockSpec((tm, 1), lambda i, k: (i, 0)),    # rsqrt(in_deg)
                pl.BlockSpec((1, op), lambda i, k: (0, 0)),    # b2
            ],
            out_specs=pl.BlockSpec((tm, op), lambda i, k: (i, 0)),
            scratch_shapes=[pltpu.VMEM((tm, op), jnp.float32)],
        ),
        compiler_params=pltpu.CompilerParams(
            dimension_semantics=("parallel", "arbitrary")),
        cost_estimate=pl.CostEstimate(
            flops=flops, transcendentals=0, bytes_accessed=bytes_accessed),
    )(adj, hw, nd, b2)


# ----------------------------------------------------------------------------
# Forward pass
# ----------------------------------------------------------------------------
@jax.jit
def gcn_forward(adj, x, params):
    n = adj.shape[0]
    in_feats = x.shape[1]
    h_feats = params["w1"].shape[1]
    out_size = params["w2"].shape[1]

    n_pad = _round_up(n, 128)
    tm, tk = _pick_tiles(n_pad)
    fp = _round_up(in_feats, 128)
    hp = _round_up(h_feats, 128)
    op = _round_up(out_size, 128)

    adj_f = adj.astype(jnp.float32)
    # DGL GraphConv(norm='both'): rsqrt of out/in degrees, clamped to >= 1.
    ns = jax.lax.rsqrt(jnp.maximum(jnp.sum(adj_f, axis=0), 1.0))  # per source
    nd = jax.lax.rsqrt(jnp.maximum(jnp.sum(adj_f, axis=1), 1.0))  # per dest

    # Pre-apply the source normalization to X (O(N*F) glue, fused by XLA) so
    # the kernel's inner loop is a bare bf16 matmul.
    xs = x.astype(jnp.float32) * ns[:, None]

    # Pad + cast (0/1 adjacency is exact in bf16).
    adj_p = jnp.zeros((n_pad, n_pad), jnp.bfloat16).at[:n, :n].set(
        adj_f.astype(jnp.bfloat16))
    xs_p = jnp.zeros((n_pad, fp), jnp.bfloat16).at[:n, :in_feats].set(
        xs.astype(jnp.bfloat16))
    nd_p = jnp.zeros((n_pad, 1), jnp.float32).at[:n, 0].set(nd)
    ns_p = jnp.zeros((n_pad, 1), jnp.float32).at[:n, 0].set(ns)  # zeros kill
    # garbage in padded rows of the layer-1 intermediate.
    w1_p = jnp.zeros((fp, hp), jnp.float32).at[:in_feats, :h_feats].set(
        params["w1"].astype(jnp.float32))
    b1_p = jnp.zeros((1, hp), jnp.float32).at[0, :h_feats].set(
        params["b1"].astype(jnp.float32))
    w2_p = jnp.zeros((hp, op), jnp.float32).at[:h_feats, :out_size].set(
        params["w2"].astype(jnp.float32))
    b2_p = jnp.zeros((1, op), jnp.float32).at[0, :out_size].set(
        params["b2"].astype(jnp.float32))

    hw = _layer1(adj_p, xs_p, nd_p, ns_p, w1_p, b1_p, w2_p, tm=tm, tk=tk)
    out = _layer2(adj_p, hw, nd_p, b2_p, tm=tm, tk=tk)
    return out[:n, :out_size]


# ----------------------------------------------------------------------------
# Reference, init, test
# ----------------------------------------------------------------------------
def gcn_forward_ref(adj, x, params):
    """Pure-JAX f32 reference."""
    adj = adj.astype(jnp.float32)
    ns = jax.lax.rsqrt(jnp.maximum(adj.sum(axis=0), 1.0))
    nd = jax.lax.rsqrt(jnp.maximum(adj.sum(axis=1), 1.0))
    a_norm = nd[:, None] * adj * ns[None, :]
    h = jnp.maximum(a_norm @ x @ params["w1"] + params["b1"], 0.0)
    return a_norm @ h @ params["w2"] + params["b2"]


def _glorot_uniform(key, shape):
    fan_in, fan_out = shape
    limit = jnp.sqrt(6.0 / (fan_in + fan_out))
    return jax.random.uniform(key, shape, jnp.float32, -limit, limit)


def init_params(key, in_feats, h_feats, out_size):
    k1, k2 = jax.random.split(key)
    return {
        "w1": _glorot_uniform(k1, (in_feats, h_feats)),
        "b1": jnp.zeros((h_feats,), jnp.float32),
        "w2": _glorot_uniform(k2, (h_feats, out_size)),
        "b2": jnp.zeros((out_size,), jnp.float32),
    }


def _check(num_nodes, in_feats, h_feats, out_size, seed):
    key = jax.random.PRNGKey(seed)
    k_graph, k_feat, k_params = jax.random.split(key, 3)
    adj = jax.random.bernoulli(
        k_graph, p=0.3, shape=(num_nodes, num_nodes)).astype(jnp.float32)
    x = jax.random.normal(k_feat, (num_nodes, in_feats), jnp.float32)
    params = init_params(k_params, in_feats, h_feats, out_size)

    out = jax.block_until_ready(gcn_forward(adj, x, params))
    ref = gcn_forward_ref(adj, x, params)
    assert out.shape == (num_nodes, out_size)
    rel = jnp.linalg.norm(out - ref) / (jnp.linalg.norm(ref) + 1e-12)
    assert float(rel) < 2e-2, f"relative error too large: {float(rel)}"


if __name__ == "__main__":
    # Small graph (single tile, padded to 128).
    _check(num_nodes=16, in_feats=8, h_feats=32, out_size=4, seed=0)
    # Larger graph exercising multi-tile grid + accumulation over k tiles.
    _check(num_nodes=300, in_feats=12, h_feats=48, out_size=6, seed=0)
    print("KERNEL_OK")
</pallas_src>

<mosaic_0001>
module attributes {stable_mosaic.version = 11 : i64} {
  func.func @_layer2_kernel(%arg0: i32, %arg1: i32, %arg2: memref<128x128xbf16, #tpu.memory_space<vmem>>, %arg3: memref<128x128xbf16, #tpu.memory_space<vmem>>, %arg4: memref<128x1xf32, #tpu.memory_space<vmem>>, %arg5: memref<1x128xf32, #tpu.memory_space<vmem>>, %arg6: memref<128x128xf32, #tpu.memory_space<vmem>>, %arg7: memref<128x128xf32, #tpu.memory_space<vmem>>) attributes {dimension_semantics = [#tpu.dimension_semantics<parallel>, #tpu.dimension_semantics<arbitrary>], iteration_bounds = array<i64: 1, 1>, scalar_prefetch = 0 : i64, scratch_operands = 1 : i64, tpu.core_type = #tpu.core_type<tc>, window_params = [{transform_indices = @transform_0, window_bounds = array<i64: 128, 128>}, {transform_indices = @transform_1, window_bounds = array<i64: 128, 128>}, {transform_indices = @transform_2, window_bounds = array<i64: 128, 1>}, {pipeline_mode = #tpu.pipeline_mode<synchronous>, transform_indices = @transform_3, window_bounds = array<i64: 1, 128>}, {transform_indices = @transform_4, window_bounds = array<i64: 128, 128>}]} {
    %c0_i32 = arith.constant 0 : i32
    %0 = arith.cmpi eq, %arg1, %c0_i32 : i32
    %1 = arith.extui %0 : i1 to i32
    %c0_i32_0 = arith.constant 0 : i32
    %2 = arith.cmpi ne, %1, %c0_i32_0 : i32
    scf.if %2 {
      %cst_10 = arith.constant 0.000000e+00 : f32
      %12 = vector.broadcast %cst_10 : f32 to vector<128x128xf32>
      %c0_11 = arith.constant 0 : index
      %c0_12 = arith.constant 0 : index
      %13 = vector.load %arg7[%c0_11, %c0_12] : memref<128x128xf32, #tpu.memory_space<vmem>>, vector<128x128xf32>
      tpu.vector_store %arg7[%c0_11, %c0_12], %12 {strides = array<i32>} : memref<128x128xf32, #tpu.memory_space<vmem>>, vector<128x128xf32>,
    } else {
    }
    %c0 = arith.constant 0 : index
    %c0_1 = arith.constant 0 : index
    %3 = vector.load %arg7[%c0, %c0_1] : memref<128x128xf32, #tpu.memory_space<vmem>>, vector<128x128xf32>
    %c0_2 = arith.constant 0 : index
    %c0_3 = arith.constant 0 : index
    %4 = vector.load %arg2[%c0_2, %c0_3] : memref<128x128xbf16, #tpu.memory_space<vmem>>, vector<128x128xbf16>
    %c0_4 = arith.constant 0 : index
    %c0_5 = arith.constant 0 : index
    %5 = vector.load %arg3[%c0_4, %c0_5] : memref<128x128xbf16, #tpu.memory_space<vmem>>, vector<128x128xbf16>
    %cst = arith.constant dense<0.000000e+00> : vector<128x128xf32>
    %6 = tpu.matmul %4, %5, %cst {dimension_numbers = #tpu.dot_dimension_numbers<[1], [0], [0], [1], [0, 0, 1, 1], [], []>} : vector<128x128xbf16>, vector<128x128xbf16>, vector<128x128xf32> -> vector<128x128xf32>
    %7 = arith.addf %3, %6 : vector<128x128xf32>
    %c0_6 = arith.constant 0 : index
    %c0_7 = arith.constant 0 : index
    %8 = vector.load %arg7[%c0_6, %c0_7] : memref<128x128xf32, #tpu.memory_space<vmem>>, vector<128x128xf32>
    tpu.vector_store %arg7[%c0_6, %c0_7], %7 {strides = array<i32>} : memref<128x128xf32, #tpu.memory_space<vmem>>, vector<128x128xf32>,
    %c0_i32_8 = arith.constant 0 : i32
    %9 = arith.cmpi eq, %arg1, %c0_i32_8 : i32
    %10 = arith.extui %9 : i1 to i32
    %c0_i32_9 = arith.constant 0 : i32
    %11 = arith.cmpi ne, %10, %c0_i32_9 : i32
    scf.if %11 {
      %c0_10 = arith.constant 0 : index
      %c0_11 = arith.constant 0 : index
      %12 = vector.load %arg7[%c0_10, %c0_11] : memref<128x128xf32, #tpu.memory_space<vmem>>, vector<128x128xf32>
      %c0_12 = arith.constant 0 : index
      %c0_13 = arith.constant 0 : index
      %13 = vector.load %arg4[%c0_12, %c0_13] : memref<128x1xf32, #tpu.memory_space<vmem>>, vector<128x1xf32>
      %14 = vector.broadcast %13 : vector<128x1xf32> to vector<128x128xf32>
      %15 = arith.mulf %12, %14 : vector<128x128xf32>
      %c0_14 = arith.constant 0 : index
      %c0_15 = arith.constant 0 : index
      %16 = vector.load %arg5[%c0_14, %c0_15] : memref<1x128xf32, #tpu.memory_space<vmem>>, vector<1x128xf32>
      %17 = vector.broadcast %16 : vector<1x128xf32> to vector<128x128xf32>
      %18 = arith.addf %15, %17 : vector<128x128xf32>
      %c0_16 = arith.constant 0 : index
      %c0_17 = arith.constant 0 : index
      %19 = vector.load %arg6[%c0_16, %c0_17] : memref<128x128xf32, #tpu.memory_space<vmem>>, vector<128x128xf32>
      tpu.vector_store %arg6[%c0_16, %c0_17], %18 {strides = array<i32>} : memref<128x128xf32, #tpu.memory_space<vmem>>, vector<128x128xf32>,
    } else {
    }
    return
  }
  func.func @transform_0(%arg0: i32, %arg1: i32) -> (i32, i32) {
    %c0_i32 = arith.constant 0 : i32
    return %arg0, %arg1 : i32, i32
  }
  func.func @transform_1(%arg0: i32, %arg1: i32) -> (i32, i32) {
    %c0_i32 = arith.constant 0 : i32
    %c0_i32_0 = arith.constant 0 : i32
    return %arg1, %c0_i32 : i32, i32
  }
  func.func @transform_2(%arg0: i32, %arg1: i32) -> (i32, i32) {
    %c0_i32 = arith.constant 0 : i32
    %c0_i32_0 = arith.constant 0 : i32
    return %arg0, %c0_i32 : i32, i32
  }
  func.func @transform_3(%arg0: i32, %arg1: i32) -> (i32, i32) {
    %c0_i32 = arith.constant 0 : i32
    %c0_i32_0 = arith.constant 0 : i32
    %c0_i32_1 = arith.constant 0 : i32
    return %c0_i32, %c0_i32_0 : i32, i32
  }
  func.func @transform_4(%arg0: i32, %arg1: i32) -> (i32, i32) {
    %c0_i32 = arith.constant 0 : i32
    %c0_i32_0 = arith.constant 0 : i32
    return %arg0, %c0_i32 : i32, i32
  }
}

module attributes {stable_mosaic.version = 11 : i64} {
  func.func @_layer1_kernel(%arg0: i32, %arg1: i32, %arg2: memref<128x128xbf16, #tpu.memory_space<vmem>>, %arg3: memref<128x128xbf16, #tpu.memory_space<vmem>>, %arg4: memref<128x1xf32, #tpu.memory_space<vmem>>, %arg5: memref<128x1xf32, #tpu.memory_space<vmem>>, %arg6: memref<128x128xf32, #tpu.memory_space<vmem>>, %arg7: memref<1x128xf32, #tpu.memory_space<vmem>>, %arg8: memref<128x128xf32, #tpu.memory_space<vmem>>, %arg9: memref<128x128xbf16, #tpu.memory_space<vmem>>, %arg10: memref<128x128xf32, #tpu.memory_space<vmem>>) attributes {dimension_semantics = [#tpu.dimension_semantics<parallel>, #tpu.dimension_semantics<arbitrary>], iteration_bounds = array<i64: 1, 1>, scalar_prefetch = 0 : i64, scratch_operands = 1 : i64, tpu.core_type = #tpu.core_type<tc>, window_params = [{transform_indices = @transform_0, window_bounds = array<i64: 128, 128>}, {transform_indices = @transform_1, window_bounds = array<i64: 128, 128>}, {transform_indices = @transform_2, window_bounds = array<i64: 128, 1>}, {transform_indices = @transform_3, window_bounds = array<i64: 128, 1>}, {pipeline_mode = #tpu.pipeline_mode<synchronous>, transform_indices = @transform_4, window_bounds = array<i64: 128, 128>}, {pipeline_mode = #tpu.pipeline_mode<synchronous>, transform_indices = @transform_5, window_bounds = array<i64: 1, 128>}, {pipeline_mode = #tpu.pipeline_mode<synchronous>, transform_indices = @transform_6, window_bounds = array<i64: 128, 128>}, {transform_indices = @transform_7, window_bounds = array<i64: 128, 128>}]} {
    %c0_i32 = arith.constant 0 : i32
    %0 = arith.cmpi eq, %arg1, %c0_i32 : i32
    %1 = arith.extui %0 : i1 to i32
    %c0_i32_0 = arith.constant 0 : i32
    %2 = arith.cmpi ne, %1, %c0_i32_0 : i32
    scf.if %2 {
      %cst_10 = arith.constant 0.000000e+00 : f32
      %12 = vector.broadcast %cst_10 : f32 to vector<128x128xf32>
      %c0_11 = arith.constant 0 : index
      %c0_12 = arith.constant 0 : index
      %13 = vector.load %arg10[%c0_11, %c0_12] : memref<128x128xf32, #tpu.memory_space<vmem>>, vector<128x128xf32>
      tpu.vector_store %arg10[%c0_11, %c0_12], %12 {strides = array<i32>} : memref<128x128xf32, #tpu.memory_space<vmem>>, vector<128x128xf32>,
    } else {
    }
    %c0 = arith.constant 0 : index
    %c0_1 = arith.constant 0 : index
    %3 = vector.load %arg10[%c0, %c0_1] : memref<128x128xf32, #tpu.memory_space<vmem>>, vector<128x128xf32>
    %c0_2 = arith.constant 0 : index
    %c0_3 = arith.constant 0 : index
    %4 = vector.load %arg2[%c0_2, %c0_3] : memref<128x128xbf16, #tpu.memory_space<vmem>>, vector<128x128xbf16>
    %c0_4 = arith.constant 0 : index
    %c0_5 = arith.constant 0 : index
    %5 = vector.load %arg3[%c0_4, %c0_5] : memref<128x128xbf16, #tpu.memory_space<vmem>>, vector<128x128xbf16>
    %cst = arith.constant dense<0.000000e+00> : vector<128x128xf32>
    %6 = tpu.matmul %4, %5, %cst {dimension_numbers = #tpu.dot_dimension_numbers<[1], [0], [0], [1], [0, 0, 1, 1], [], []>} : vector<128x128xbf16>, vector<128x128xbf16>, vector<128x128xf32> -> vector<128x128xf32>
    %7 = arith.addf %3, %6 : vector<128x128xf32>
    %c0_6 = arith.constant 0 : index
    %c0_7 = arith.constant 0 : index
    %8 = vector.load %arg10[%c0_6, %c0_7] : memref<128x128xf32, #tpu.memory_space<vmem>>, vector<128x128xf32>
    tpu.vector_store %arg10[%c0_6, %c0_7], %7 {strides = array<i32>} : memref<128x128xf32, #tpu.memory_space<vmem>>, vector<128x128xf32>,
    %c0_i32_8 = arith.constant 0 : i32
    %9 = arith.cmpi eq, %arg1, %c0_i32_8 : i32
    %10 = arith.extui %9 : i1 to i32
    %c0_i32_9 = arith.constant 0 : i32
    %11 = arith.cmpi ne, %10, %c0_i32_9 : i32
    scf.if %11 {
      %c0_10 = arith.constant 0 : index
      %c0_11 = arith.constant 0 : index
      %12 = vector.load %arg10[%c0_10, %c0_11] : memref<128x128xf32, #tpu.memory_space<vmem>>, vector<128x128xf32>
      %c0_12 = arith.constant 0 : index
      %c0_13 = arith.constant 0 : index
      %13 = vector.load %arg4[%c0_12, %c0_13] : memref<128x1xf32, #tpu.memory_space<vmem>>, vector<128x1xf32>
      %14 = vector.broadcast %13 : vector<128x1xf32> to vector<128x128xf32>
      %15 = arith.mulf %12, %14 : vector<128x128xf32>
      %c0_14 = arith.constant 0 : index
      %c0_15 = arith.constant 0 : index
      %16 = vector.load %arg6[%c0_14, %c0_15] : memref<128x128xf32, #tpu.memory_space<vmem>>, vector<128x128xf32>
      %cst_16 = arith.constant dense<0.000000e+00> : vector<128x128xf32>
      %17 = tpu.matmul %15, %16, %cst_16 {dimension_numbers = #tpu.dot_dimension_numbers<[1], [0], [0], [1], [0, 0, 1, 1], [], []>} : vector<128x128xf32>, vector<128x128xf32>, vector<128x128xf32> -> vector<128x128xf32>
      %c0_17 = arith.constant 0 : index
      %c0_18 = arith.constant 0 : index
      %18 = vector.load %arg7[%c0_17, %c0_18] : memref<1x128xf32, #tpu.memory_space<vmem>>, vector<1x128xf32>
      %19 = vector.broadcast %18 : vector<1x128xf32> to vector<128x128xf32>
      %20 = arith.addf %17, %19 : vector<128x128xf32>
      %cst_19 = arith.constant 0.000000e+00 : f32
      %21 = vector.broadcast %cst_19 : f32 to vector<128x128xf32>
      %22 = arith.maximumf %20, %21 : vector<128x128xf32>
      %c0_20 = arith.constant 0 : index
      %c0_21 = arith.constant 0 : index
      %23 = vector.load %arg8[%c0_20, %c0_21] : memref<128x128xf32, #tpu.memory_space<vmem>>, vector<128x128xf32>
      %cst_22 = arith.constant dense<0.000000e+00> : vector<128x128xf32>
      %24 = tpu.matmul %22, %23, %cst_22 {dimension_numbers = #tpu.dot_dimension_numbers<[1], [0], [0], [1], [0, 0, 1, 1], [], []>} : vector<128x128xf32>, vector<128x128xf32>, vector<128x128xf32> -> vector<128x128xf32>
      %c0_23 = arith.constant 0 : index
      %c0_24 = arith.constant 0 : index
      %25 = vector.load %arg5[%c0_23, %c0_24] : memref<128x1xf32, #tpu.memory_space<vmem>>, vector<128x1xf32>
      %26 = vector.broadcast %25 : vector<128x1xf32> to vector<128x128xf32>
      %27 = arith.mulf %24, %26 : vector<128x128xf32>
      %28 = arith.truncf %27 : vector<128x128xf32> to vector<128x128xbf16>
      %c0_25 = arith.constant 0 : index
      %c0_26 = arith.constant 0 : index
      %29 = vector.load %arg9[%c0_25, %c0_26] : memref<128x128xbf16, #tpu.memory_space<vmem>>, vector<128x128xbf16>
      tpu.vector_store %arg9[%c0_25, %c0_26], %28 {strides = array<i32>} : memref<128x128xbf16, #tpu.memory_space<vmem>>, vector<128x128xbf16>,
    } else {
    }
    return
  }
  func.func @transform_0(%arg0: i32, %arg1: i32) -> (i32, i32) {
    %c0_i32 = arith.constant 0 : i32
    return %arg0, %arg1 : i32, i32
  }
  func.func @transform_1(%arg0: i32, %arg1: i32) -> (i32, i32) {
    %c0_i32 = arith.constant 0 : i32
    %c0_i32_0 = arith.constant 0 : i32
    return %arg1, %c0_i32 : i32, i32
  }
  func.func @transform_2(%arg0: i32, %arg1: i32) -> (i32, i32) {
    %c0_i32 = arith.constant 0 : i32
    %c0_i32_0 = arith.constant 0 : i32
    return %arg0, %c0_i32 : i32, i32
  }
  func.func @transform_3(%arg0: i32, %arg1: i32) -> (i32, i32) {
    %c0_i32 = arith.constant 0 : i32
    %c0_i32_0 = arith.constant 0 : i32
    return %arg0, %c0_i32 : i32, i32
  }
  func.func @transform_4(%arg0: i32, %arg1: i32) -> (i32, i32) {
    %c0_i32 = arith.constant 0 : i32
    %c0_i32_0 = arith.constant 0 : i32
    %c0_i32_1 = arith.constant 0 : i32
    return %c0_i32, %c0_i32_0 : i32, i32
  }
  func.func @transform_5(%arg0: i32, %arg1: i32) -> (i32, i32) {
    %c0_i32 = arith.constant 0 : i32
    %c0_i32_0 = arith.constant 0 : i32
    %c0_i32_1 = arith.constant 0 : i32
    return %c0_i32, %c0_i32_0 : i32, i32
  }
  func.func @transform_6(%arg0: i32, %arg1: i32) -> (i32, i32) {
    %c0_i32 = arith.constant 0 : i32
    %c0_i32_0 = arith.constant 0 : i32
    %c0_i32_1 = arith.constant 0 : i32
    return %c0_i32, %c0_i32_0 : i32, i32
  }
  func.func @transform_7(%arg0: i32, %arg1: i32) -> (i32, i32) {
    %c0_i32 = arith.constant 0 : i32
    %c0_i32_0 = arith.constant 0 : i32
    return %arg0, %c0_i32 : i32, i32
  }
}

</mosaic_0001>

<llo_original>
// kernel: gcn_forward.3
$region0: #{gcn_forward.3}
  #allocation0 [shape = 'u32[]', space=smem, size = 0x4, offset = 0x4, fixed_abs, tag = 'smem constant byte address 0x4 - core index']
  #allocation1 [shape = 'u32[144,128]{1,0:T(1,128)}', space=vmem, size = 0x12000, scoped, tag = 'internal scratch']
  #allocation2 [shape = 'f32[128,128]{1,0:T(8,128)}', space=vmem, size = 0x10000, scoped, tag = 'scratch operand']
  %s0 = inlined_call_operand.vmem [shape: bf16[128,128], index: 0, kind: input, shape index: {}]
  %s1 = inlined_call_operand.vmem [shape: bf16[128,128], index: 1, kind: input, shape index: {}]
  %s2 = inlined_call_operand.vmem [shape: f32[128,1], index: 2, kind: input, shape index: {}]
  %s3 = inlined_call_operand.vmem [shape: f32[1,128], index: 3, kind: input, shape index: {}]
  %s4 = inlined_call_operand.vmem [shape: f32[128,128], index: 4, kind: output, shape index: {}]
  %s5 = sld [smem:[#allocation0]]
  $region34: #{gcn_forward.3} parent=0
    _
  %s7 = ssub.s32 1, %s5
  %s8 = scalar_select 0, %s7, %s5
  // Predicated region
  $region2: #{gcn_forward.3} parent=0 // pred_check
    _
  $region3: #{gcn_forward.3} parent=0 // pred_check_branch
    %10 = sbr.rel (0) target = $region5
  $region4: #{gcn_forward.3} parent=0 // pred_region
    _
  $region5: #{gcn_forward.3} parent=0 // pred_fallthru
    _
  // Predicated region
  $region6: #{gcn_forward.3} parent=0 // pred_check
    _
  $region7: #{gcn_forward.3} parent=0 // pred_check_branch
    %12 = sbr.rel (0) target = $region9
  $region8: #{gcn_forward.3} parent=0 // pred_region
    _
  $region9: #{gcn_forward.3} parent=0 // pred_fallthru
    _
  // Predicated region
  $region10: #{gcn_forward.3} parent=0 // pred_check
    _
  $region11: #{gcn_forward.3} parent=0 // pred_check_branch
    %14 = sbr.rel (0) target = $region13
  $region12: #{gcn_forward.3} parent=0 // pred_region
    _
  $region13: #{gcn_forward.3} parent=0 // pred_fallthru
    _
  // Predicated region
  $region14: #{gcn_forward.3} parent=0 // pred_check
    _
  $region15: #{gcn_forward.3} parent=0 // pred_check_branch
    %16 = sbr.rel (0) target = $region17
  $region16: #{gcn_forward.3} parent=0 // pred_region
    _
  $region17: #{gcn_forward.3} parent=0 // pred_fallthru
    _
  %p18 = scmp.eq.s32.totalorder 0, 0
  // Predicated region
  $region18: #{gcn_forward.3} parent=0 // pred_check
    %p19 = pneg %p18
  $region19: #{gcn_forward.3} parent=0 // pred_check_branch
    %21 = sbr.rel (%p19) target = $region21
  $region20: #{gcn_forward.3} parent=0 // pred_region
    %22 = vst [vmem:[#allocation2] sm:$0xff] 0.0
    %23 = vst [vmem:[#allocation2 + $0x8] sm:$0xff] 0.0
    %24 = vst [vmem:[#allocation2 + $0x10] sm:$0xff] 0.0
    %25 = vst [vmem:[#allocation2 + $0x18] sm:$0xff] 0.0
    %26 = vst [vmem:[#allocation2 + $0x20] sm:$0xff] 0.0
    %27 = vst [vmem:[#allocation2 + $0x28] sm:$0xff] 0.0
    %28 = vst [vmem:[#allocation2 + $0x30] sm:$0xff] 0.0
    %29 = vst [vmem:[#allocation2 + $0x38] sm:$0xff] 0.0
    %30 = vst [vmem:[#allocation2 + $0x40] sm:$0xff] 0.0
    %31 = vst [vmem:[#allocation2 + $0x48] sm:$0xff] 0.0
    %32 = vst [vmem:[#allocation2 + $0x50] sm:$0xff] 0.0
    %33 = vst [vmem:[#allocation2 + $0x58] sm:$0xff] 0.0
    %34 = vst [vmem:[#allocation2 + $0x60] sm:$0xff] 0.0
    %35 = vst [vmem:[#allocation2 + $0x68] sm:$0xff] 0.0
    %36 = vst [vmem:[#allocation2 + $0x70] sm:$0xff] 0.0
    %37 = vst [vmem:[#allocation2 + $0x78] sm:$0xff] 0.0
  $region21: #{gcn_forward.3} parent=0 // pred_fallthru
    _
  %v38 = vld [vmem:[#allocation2] sm:$0xff]
  %v39 = vld [vmem:[#allocation2 + $0x8] sm:$0xff]
  %v40 = vld [vmem:[#allocation2 + $0x10] sm:$0xff]
  %v41 = vld [vmem:[#allocation2 + $0x18] sm:$0xff]
  %v42 = vld [vmem:[#allocation2 + $0x20] sm:$0xff]
  %v43 = vld [vmem:[#allocation2 + $0x28] sm:$0xff]
  %v44 = vld [vmem:[#allocation2 + $0x30] sm:$0xff]
  %v45 = vld [vmem:[#allocation2 + $0x38] sm:$0xff]
  %v46 = vld [vmem:[#allocation2 + $0x40] sm:$0xff]
  %v47 = vld [vmem:[#allocation2 + $0x48] sm:$0xff]
  %v48 = vld [vmem:[#allocation2 + $0x50] sm:$0xff]
  %v49 = vld [vmem:[#allocation2 + $0x58] sm:$0xff]
  %v50 = vld [vmem:[#allocation2 + $0x60] sm:$0xff]
  %v51 = vld [vmem:[#allocation2 + $0x68] sm:$0xff]
  %v52 = vld [vmem:[#allocation2 + $0x70] sm:$0xff]
  %v53 = vld [vmem:[#allocation2 + $0x78] sm:$0xff]
  %v54 = vld [vmem:[%s0] sm:$0xf]
  %v55 = vld [vmem:[%s0 + $0x4] sm:$0xf]
  %v56 = vld [vmem:[%s0 + $0x8] sm:$0xf]
  %v57 = vld [vmem:[%s0 + $0xc] sm:$0xf]
  %v58 = vld [vmem:[%s0 + $0x10] sm:$0xf]
  %v59 = vld [vmem:[%s0 + $0x14] sm:$0xf]
  %v60 = vld [vmem:[%s0 + $0x18] sm:$0xf]
  %v61 = vld [vmem:[%s0 + $0x1c] sm:$0xf]
  %v62 = vld [vmem:[%s0 + $0x20] sm:$0xf]
  %v63 = vld [vmem:[%s0 + $0x24] sm:$0xf]
  %v64 = vld [vmem:[%s0 + $0x28] sm:$0xf]
  %v65 = vld [vmem:[%s0 + $0x2c] sm:$0xf]
  %v66 = vld [vmem:[%s0 + $0x30] sm:$0xf]
  %v67 = vld [vmem:[%s0 + $0x34] sm:$0xf]
  %v68 = vld [vmem:[%s0 + $0x38] sm:$0xf]
  %v69 = vld [vmem:[%s0 + $0x3c] sm:$0xf]
  %v70 = vld [vmem:[%s1] sm:$0xf]
  %v71 = vld [vmem:[%s1 + $0x4] sm:$0xf]
  %v72 = vld [vmem:[%s1 + $0x8] sm:$0xf]
  %v73 = vld [vmem:[%s1 + $0xc] sm:$0xf]
  %v74 = vld [vmem:[%s1 + $0x10] sm:$0xf]
  %v75 = vld [vmem:[%s1 + $0x14] sm:$0xf]
  %v76 = vld [vmem:[%s1 + $0x18] sm:$0xf]
  %v77 = vld [vmem:[%s1 + $0x1c] sm:$0xf]
  %v78 = vld [vmem:[%s1 + $0x20] sm:$0xf]
  %v79 = vld [vmem:[%s1 + $0x24] sm:$0xf]
  %v80 = vld [vmem:[%s1 + $0x28] sm:$0xf]
  %v81 = vld [vmem:[%s1 + $0x2c] sm:$0xf]
  %v82 = vld [vmem:[%s1 + $0x30] sm:$0xf]
  %v83 = vld [vmem:[%s1 + $0x34] sm:$0xf]
  %v84 = vld [vmem:[%s1 + $0x38] sm:$0xf]
  %v85 = vld [vmem:[%s1 + $0x3c] sm:$0xf]
  %v102 = vunpack.c.l.b16 %v54
  %v103 = vunpack.c.l.b16 %v55
  %v104 = vunpack.c.l.b16 %v56
  %v105 = vunpack.c.l.b16 %v57
  %v106 = vunpack.c.l.b16 %v58
  %v107 = vunpack.c.l.b16 %v59
  %v108 = vunpack.c.l.b16 %v60
  %v109 = vunpack.c.l.b16 %v61
  %v110 = vunpack.c.l.b16 %v62
  %v111 = vunpack.c.l.b16 %v63
  %v112 = vunpack.c.l.b16 %v64
  %v113 = vunpack.c.l.b16 %v65
  %v114 = vunpack.c.l.b16 %v66
  %v115 = vunpack.c.l.b16 %v67
  %v116 = vunpack.c.l.b16 %v68
  %v117 = vunpack.c.l.b16 %v69
  %v118 = vpack.c.b16 %v103, %v102
  %v119 = vpack.c.b16 %v105, %v104
  %v120 = vpack.c.b16 %v107, %v106
  %v121 = vpack.c.b16 %v109, %v108
  %v122 = vpack.c.b16 %v111, %v110
  %v123 = vpack.c.b16 %v113, %v112
  %v124 = vpack.c.b16 %v115, %v114
  %v125 = vpack.c.b16 %v117, %v116
  %v150 = vunpack.c.l.b16 %v70
  %v151 = vunpack.c.l.b16 %v71
  %v152 = vunpack.c.l.b16 %v72
  %v153 = vunpack.c.l.b16 %v73
  %v154 = vunpack.c.l.b16 %v74
  %v155 = vunpack.c.l.b16 %v75
  %v156 = vunpack.c.l.b16 %v76
  %v157 = vunpack.c.l.b16 %v77
  %v158 = vunpack.c.l.b16 %v78
  %v159 = vunpack.c.l.b16 %v79
  %v160 = vunpack.c.l.b16 %v80
  %v161 = vunpack.c.l.b16 %v81
  %v162 = vunpack.c.l.b16 %v82
  %v163 = vunpack.c.l.b16 %v83
  %v164 = vunpack.c.l.b16 %v84
  %v165 = vunpack.c.l.b16 %v85
  %v166 = vpack.c.b16 %v151, %v150
  %v167 = vpack.c.b16 %v153, %v152
  %v168 = vpack.c.b16 %v155, %v154
  %v169 = vpack.c.b16 %v157, %v156
  %v170 = vpack.c.b16 %v159, %v158
  %v171 = vpack.c.b16 %v161, %v160
  %v172 = vpack.c.b16 %v163, %v162
  %v173 = vpack.c.b16 %v165, %v164
  %182 = vmatprep.subr.bf16.mxu0 0
  %183 = vmatpush1.bf16.msra.mxu0 %v173
  %184 = vmatprep.subr.bf16.mxu0 0
  %185 = vmatpush1.bf16.msra.mxu0 %v172
  %186 = vmatprep.subr.bf16.mxu0 0
  %187 = vmatpush1.bf16.msra.mxu0 %v171
  %188 = vmatprep.subr.bf16.mxu0 0
  %189 = vmatpush1.bf16.msra.mxu0 %v170
  %190 = vmatprep.subr.bf16.mxu0 0
  %191 = vmatpush1.bf16.msra.mxu0 %v169
  %192 = vmatprep.subr.bf16.mxu0 0
  %193 = vmatpush1.bf16.msra.mxu0 %v168
  %194 = vmatprep.subr.bf16.mxu0 0
  %195 = vmatpush1.bf16.msra.mxu0 %v167
  %196 = vmatprep.subr.bf16.mxu0 0
  %197 = vmatpush1.bf16.msra.mxu0 %v166
  %198 = vmatprep.subr.bf16.mxu0 0
  %199 = vmatpush2.bf16.msra.mxu0 0
  %200 = vmatprep.subr.bf16.mxu0 0
  %201 = vmatpush2.bf16.msra.mxu0 0
  %202 = vmatprep.subr.bf16.mxu0 0
  %203 = vmatpush2.bf16.msra.mxu0 0
  %204 = vmatprep.subr.bf16.mxu0 0
  %205 = vmatpush2.bf16.msra.mxu0 0
  %206 = vmatprep.subr.bf16.mxu0 0
  %207 = vmatpush2.bf16.msra.mxu0 0
  %208 = vmatprep.subr.bf16.mxu0 0
  %209 = vmatpush2.bf16.msra.mxu0 0
  %210 = vmatprep.subr.bf16.mxu0 0
  %211 = vmatpush2.bf16.msra.mxu0 0
  %212 = vmatprep.subr.bf16.mxu0 0
  %213 = vmatpush2.bf16.msra.mxu0 0
  %214 = vmatprep.mubr.bf16.mxu0 0
  %215 = vmatmul.mubr.bf16.gmra.mxu0 %v118
  %v216 = vpop.f32.mrf.mxu0
  %v217 = vadd.f32 0.0, %v216
  %v218 = vpop.f32.mrf.mxu0
  %v219 = vpop.f32.mrf.mxu0
  %v220 = vadd.f32 0.0, %v219
  %v221 = vpop.f32.mrf.mxu0
  %222 = vmatprep.mubr.bf16.mxu0 0
  %223 = vmatmul.mubr.bf16.gmra.mxu0 %v119
  %v224 = vpop.f32.mrf.mxu0
  %v225 = vadd.f32 0.0, %v224
  %v226 = vpop.f32.mrf.mxu0
  %v227 = vpop.f32.mrf.mxu0
  %v228 = vadd.f32 0.0, %v227
  %v229 = vpop.f32.mrf.mxu0
  %230 = vmatprep.mubr.bf16.mxu0 0
  %231 = vmatmul.mubr.bf16.gmra.mxu0 %v120
  %v232 = vpop.f32.mrf.mxu0
  %v233 = vadd.f32 0.0, %v232
  %v234 = vpop.f32.mrf.mxu0
  %v235 = vpop.f32.mrf.mxu0
  %v236 = vadd.f32 0.0, %v235
  %v237 = vpop.f32.mrf.mxu0
  %238 = vmatprep.mubr.bf16.mxu0 0
  %239 = vmatmul.mubr.bf16.gmra.mxu0 %v121
  %v240 = vpop.f32.mrf.mxu0
  %v241 = vadd.f32 0.0, %v240
  %v242 = vpop.f32.mrf.mxu0
  %v243 = vpop.f32.mrf.mxu0
  %v244 = vadd.f32 0.0, %v243
  %v245 = vpop.f32.mrf.mxu0
  %246 = vmatprep.mubr.bf16.mxu0 0
  %247 = vmatmul.mubr.bf16.gmra.mxu0 %v122
  %v248 = vpop.f32.mrf.mxu0
  %v249 = vadd.f32 0.0, %v248
  %v250 = vpop.f32.mrf.mxu0
  %v251 = vpop.f32.mrf.mxu0
  %v252 = vadd.f32 0.0, %v251
  %v253 = vpop.f32.mrf.mxu0
  %254 = vmatprep.mubr.bf16.mxu0 0
  %255 = vmatmul.mubr.bf16.gmra.mxu0 %v123
  %v256 = vpop.f32.mrf.mxu0
  %v257 = vadd.f32 0.0, %v256
  %v258 = vpop.f32.mrf.mxu0
  %v259 = vpop.f32.mrf.mxu0
  %v260 = vadd.f32 0.0, %v259
  %v261 = vpop.f32.mrf.mxu0
  %262 = vmatprep.mubr.bf16.mxu0 0
  %263 = vmatmul.mubr.bf16.gmra.mxu0 %v124
  %v264 = vpop.f32.mrf.mxu0
  %v265 = vadd.f32 0.0, %v264
  %v266 = vpop.f32.mrf.mxu0
  %v267 = vpop.f32.mrf.mxu0
  %v268 = vadd.f32 0.0, %v267
  %v269 = vpop.f32.mrf.mxu0
  %270 = vmatprep.mubr.bf16.mxu0 0
  %271 = vmatmul.mubr.bf16.gmra.mxu0 %v125
  %v272 = vpop.f32.mrf.mxu0
  %v273 = vadd.f32 0.0, %v272
  %v274 = vpop.f32.mrf.mxu0
  %v275 = vpop.f32.mrf.mxu0
  %v276 = vadd.f32 0.0, %v275
  %v277 = vpop.f32.mrf.mxu0
  %278 = vdwg.mxu0
  %v279 = vadd.f32 %v38, %v217
  %v280 = vadd.f32 %v39, %v220
  %v281 = vadd.f32 %v40, %v225
  %v282 = vadd.f32 %v41, %v228
  %v283 = vadd.f32 %v42, %v233
  %v284 = vadd.f32 %v43, %v236
  %v285 = vadd.f32 %v44, %v241
  %v286 = vadd.f32 %v45, %v244
  %v287 = vadd.f32 %v46, %v249
  %v288 = vadd.f32 %v47, %v252
  %v289 = vadd.f32 %v48, %v257
  %v290 = vadd.f32 %v49, %v260
  %v291 = vadd.f32 %v50, %v265
  %v292 = vadd.f32 %v51, %v268
  %v293 = vadd.f32 %v52, %v273
  %v294 = vadd.f32 %v53, %v276
  %295 = vst [vmem:[#allocation2] sm:$0xff] %v279
  %296 = vst [vmem:[#allocation2 + $0x8] sm:$0xff] %v280
  %297 = vst [vmem:[#allocation2 + $0x10] sm:$0xff] %v281
  %298 = vst [vmem:[#allocation2 + $0x18] sm:$0xff] %v282
  %299 = vst [vmem:[#allocation2 + $0x20] sm:$0xff] %v283
  %300 = vst [vmem:[#allocation2 + $0x28] sm:$0xff] %v284
  %301 = vst [vmem:[#allocation2 + $0x30] sm:$0xff] %v285
  %302 = vst [vmem:[#allocation2 + $0x38] sm:$0xff] %v286
  %303 = vst [vmem:[#allocation2 + $0x40] sm:$0xff] %v287
  %304 = vst [vmem:[#allocation2 + $0x48] sm:$0xff] %v288
  %305 = vst [vmem:[#allocation2 + $0x50] sm:$0xff] %v289
  %306 = vst [vmem:[#allocation2 + $0x58] sm:$0xff] %v290
  %307 = vst [vmem:[#allocation2 + $0x60] sm:$0xff] %v291
  %308 = vst [vmem:[#allocation2 + $0x68] sm:$0xff] %v292
  %309 = vst [vmem:[#allocation2 + $0x70] sm:$0xff] %v293
  %310 = vst [vmem:[#allocation2 + $0x78] sm:$0xff] %v294
  // Predicated region
  $region22: #{gcn_forward.3} parent=0 // pred_check
    %p311 = pneg %p18
  $region23: #{gcn_forward.3} parent=0 // pred_check_branch
    %313 = sbr.rel (%p311) target = $region25
  $region24: #{gcn_forward.3} parent=0 // pred_region
    %v314 = vld [vmem:[#allocation2] sm:$0xff]
    %v315 = vld [vmem:[#allocation2 + $0x8] sm:$0xff]
    %v316 = vld [vmem:[#allocation2 + $0x10] sm:$0xff]
    %v317 = vld [vmem:[#allocation2 + $0x18] sm:$0xff]
    %v318 = vld [vmem:[#allocation2 + $0x20] sm:$0xff]
    %v319 = vld [vmem:[#allocation2 + $0x28] sm:$0xff]
    %v320 = vld [vmem:[#allocation2 + $0x30] sm:$0xff]
    %v321 = vld [vmem:[#allocation2 + $0x38] sm:$0xff]
    %v322 = vld [vmem:[#allocation2 + $0x40] sm:$0xff]
    %v323 = vld [vmem:[#allocation2 + $0x48] sm:$0xff]
    %v324 = vld [vmem:[#allocation2 + $0x50] sm:$0xff]
    %v325 = vld [vmem:[#allocation2 + $0x58] sm:$0xff]
    %v326 = vld [vmem:[#allocation2 + $0x60] sm:$0xff]
    %v327 = vld [vmem:[#allocation2 + $0x68] sm:$0xff]
    %v328 = vld [vmem:[#allocation2 + $0x70] sm:$0xff]
    %v329 = vld [vmem:[#allocation2 + $0x78] sm:$0xff]
    %v330 = vld [vmem:[%s2] sm:$0xff]
    %v331 = vld [vmem:[%s2 + $0x8] sm:$0xff]
    %v332 = vld [vmem:[%s2 + $0x10] sm:$0xff]
    %v333 = vld [vmem:[%s2 + $0x18] sm:$0xff]
    %v334 = vld [vmem:[%s2 + $0x20] sm:$0xff]
    %v335 = vld [vmem:[%s2 + $0x28] sm:$0xff]
    %v336 = vld [vmem:[%s2 + $0x30] sm:$0xff]
    %v337 = vld [vmem:[%s2 + $0x38] sm:$0xff]
    %v338 = vld [vmem:[%s2 + $0x40] sm:$0xff]
    %v339 = vld [vmem:[%s2 + $0x48] sm:$0xff]
    %v340 = vld [vmem:[%s2 + $0x50] sm:$0xff]
    %v341 = vld [vmem:[%s2 + $0x58] sm:$0xff]
    %v342 = vld [vmem:[%s2 + $0x60] sm:$0xff]
    %v343 = vld [vmem:[%s2 + $0x68] sm:$0xff]
    %v344 = vld [vmem:[%s2 + $0x70] sm:$0xff]
    %v345 = vld [vmem:[%s2 + $0x78] sm:$0xff]
    %347 = vset.pattern.permute.xlu0 0
    %348 = vperm.xlu0 %347, %v330
    %v349 = vpop.permute.xlu0 %348
    %352 = vset.pattern.permute.xlu0 0
    %353 = vperm.xlu0 %352, %v331
    %v354 = vpop.permute.xlu0 %353
    %357 = vset.pattern.permute.xlu0 0
    %358 = vperm.xlu0 %357, %v332
    %v359 = vpop.permute.xlu0 %358
    %362 = vset.pattern.permute.xlu0 0
    %363 = vperm.xlu0 %362, %v333
    %v364 = vpop.permute.xlu0 %363
    %367 = vset.pattern.permute.xlu0 0
    %368 = vperm.xlu0 %367, %v334
    %v369 = vpop.permute.xlu0 %368
    %372 = vset.pattern.permute.xlu0 0
    %373 = vperm.xlu0 %372, %v335
    %v374 = vpop.permute.xlu0 %373
    %377 = vset.pattern.permute.xlu0 0
    %378 = vperm.xlu0 %377, %v336
    %v379 = vpop.permute.xlu0 %378
    %382 = vset.pattern.permute.xlu0 0
    %383 = vperm.xlu0 %382, %v337
    %v384 = vpop.permute.xlu0 %383
    %387 = vset.pattern.permute.xlu0 0
    %388 = vperm.xlu0 %387, %v338
    %v389 = vpop.permute.xlu0 %388
    %392 = vset.pattern.permute.xlu0 0
    %393 = vperm.xlu0 %392, %v339
    %v394 = vpop.permute.xlu0 %393
    %397 = vset.pattern.permute.xlu0 0
    %398 = vperm.xlu0 %397, %v340
    %v399 = vpop.permute.xlu0 %398
    %402 = vset.pattern.permute.xlu0 0
    %403 = vperm.xlu0 %402, %v341
    %v404 = vpop.permute.xlu0 %403
    %407 = vset.pattern.permute.xlu0 0
    %408 = vperm.xlu0 %407, %v342
    %v409 = vpop.permute.xlu0 %408
    %412 = vset.pattern.permute.xlu0 0
    %413 = vperm.xlu0 %412, %v343
    %v414 = vpop.permute.xlu0 %413
    %417 = vset.pattern.permute.xlu0 0
    %418 = vperm.xlu0 %417, %v344
    %v419 = vpop.permute.xlu0 %418
    %422 = vset.pattern.permute.xlu0 0
    %423 = vperm.xlu0 %422, %v345
    %v424 = vpop.permute.xlu0 %423
    %v426 = vmul.f32 %v314, %v349
    %v427 = vmul.f32 %v315, %v354
    %v428 = vmul.f32 %v316, %v359
    %v429 = vmul.f32 %v317, %v364
    %v430 = vmul.f32 %v318, %v369
    %v431 = vmul.f32 %v319, %v374
    %v432 = vmul.f32 %v320, %v379
    %v433 = vmul.f32 %v321, %v384
    %v434 = vmul.f32 %v322, %v389
    %v435 = vmul.f32 %v323, %v394
    %v436 = vmul.f32 %v324, %v399
    %v437 = vmul.f32 %v325, %v404
    %v438 = vmul.f32 %v326, %v409
    %v439 = vmul.f32 %v327, %v414
    %v440 = vmul.f32 %v328, %v419
    %v441 = vmul.f32 %v329, %v424
    %v442 = vld [vmem:[%s3] sm:$0x1]
    %v444 = vlaneseq
    %v445 = vshrl.u32 %v444, 7
    %v446 = vsub.s32 0, %v445
    %v447 = vrot.slane %v442, %v446
    %v449 = vadd.f32 %v426, %v447
    %v450 = vadd.f32 %v427, %v447
    %v451 = vadd.f32 %v428, %v447
    %v452 = vadd.f32 %v429, %v447
    %v453 = vadd.f32 %v430, %v447
    %v454 = vadd.f32 %v431, %v447
    %v455 = vadd.f32 %v432, %v447
    %v456 = vadd.f32 %v433, %v447
    %v457 = vadd.f32 %v434, %v447
    %v458 = vadd.f32 %v435, %v447
    %v459 = vadd.f32 %v436, %v447
    %v460 = vadd.f32 %v437, %v447
    %v461 = vadd.f32 %v438, %v447
    %v462 = vadd.f32 %v439, %v447
    %v463 = vadd.f32 %v440, %v447
    %v464 = vadd.f32 %v441, %v447
    %465 = vst [vmem:[%s4] sm:$0xff] %v449
    %466 = vst [vmem:[%s4 + $0x8] sm:$0xff] %v450
    %467 = vst [vmem:[%s4 + $0x10] sm:$0xff] %v451
    %468 = vst [vmem:[%s4 + $0x18] sm:$0xff] %v452
    %469 = vst [vmem:[%s4 + $0x20] sm:$0xff] %v453
    %470 = vst [vmem:[%s4 + $0x28] sm:$0xff] %v454
    %471 = vst [vmem:[%s4 + $0x30] sm:$0xff] %v455
    %472 = vst [vmem:[%s4 + $0x38] sm:$0xff] %v456
    %473 = vst [vmem:[%s4 + $0x40] sm:$0xff] %v457
    %474 = vst [vmem:[%s4 + $0x48] sm:$0xff] %v458
    %475 = vst [vmem:[%s4 + $0x50] sm:$0xff] %v459
    %476 = vst [vmem:[%s4 + $0x58] sm:$0xff] %v460
    %477 = vst [vmem:[%s4 + $0x60] sm:$0xff] %v461
    %478 = vst [vmem:[%s4 + $0x68] sm:$0xff] %v462
    %479 = vst [vmem:[%s4 + $0x70] sm:$0xff] %v463
    %480 = vst [vmem:[%s4 + $0x78] sm:$0xff] %v464
  $region25: #{gcn_forward.3} parent=0 // pred_fallthru
    _
  // Predicated region
  $region26: #{gcn_forward.3} parent=0 // pred_check
    _
  $region27: #{gcn_forward.3} parent=0 // pred_check_branch
    %482 = sbr.rel (0) target = $region29
  $region28: #{gcn_forward.3} parent=0 // pred_region
    _
  $region29: #{gcn_forward.3} parent=0 // pred_fallthru
    _
  // Predicated region
  $region30: #{gcn_forward.3} parent=0 // pred_check
    _
  $region31: #{gcn_forward.3} parent=0 // pred_check_branch
    %484 = sbr.rel (0) target = $region33
  $region32: #{gcn_forward.3} parent=0 // pred_region
    _
  $region33: #{gcn_forward.3} parent=0 // pred_fallthru
    _

// kernel: gcn_forward.2
$region0: #{gcn_forward.2}
  #allocation0 [shape = 'u32[]', space=smem, size = 0x4, offset = 0x4, fixed_abs, tag = 'smem constant byte address 0x4 - core index']
  #allocation1 [shape = 'u32[144,128]{1,0:T(1,128)}', space=vmem, size = 0x12000, scoped, tag = 'internal scratch']
  #allocation2 [shape = 'f32[128,128]{1,0:T(8,128)}', space=vmem, size = 0x10000, scoped, tag = 'scratch operand']
  %s0 = inlined_call_operand.vmem [shape: bf16[128,128], index: 0, kind: input, shape index: {}]
  %s1 = inlined_call_operand.vmem [shape: bf16[128,128], index: 1, kind: input, shape index: {}]
  %s2 = inlined_call_operand.vmem [shape: f32[128,1], index: 2, kind: input, shape index: {}]
  %s3 = inlined_call_operand.vmem [shape: f32[128,1], index: 3, kind: input, shape index: {}]
  %s4 = inlined_call_operand.vmem [shape: f32[128,128], index: 4, kind: input, shape index: {}]
  %s5 = inlined_call_operand.vmem [shape: f32[1,128], index: 5, kind: input, shape index: {}]
  %s6 = inlined_call_operand.vmem [shape: f32[128,128], index: 6, kind: input, shape index: {}]
  %s7 = inlined_call_operand.vmem [shape: bf16[128,128], index: 7, kind: output, shape index: {}]
  %s8 = sld [smem:[#allocation0]]
  $region46: #{gcn_forward.2} parent=0
    _
  %s10 = ssub.s32 1, %s8
  %s11 = scalar_select 0, %s10, %s8
  // Predicated region
  $region2: #{gcn_forward.2} parent=0 // pred_check
    _
  $region3: #{gcn_forward.2} parent=0 // pred_check_branch
    %13 = sbr.rel (0) target = $region5
  $region4: #{gcn_forward.2} parent=0 // pred_region
    _
  $region5: #{gcn_forward.2} parent=0 // pred_fallthru
    _
  // Predicated region
  $region6: #{gcn_forward.2} parent=0 // pred_check
    _
  $region7: #{gcn_forward.2} parent=0 // pred_check_branch
    %15 = sbr.rel (0) target = $region9
  $region8: #{gcn_forward.2} parent=0 // pred_region
    _
  $region9: #{gcn_forward.2} parent=0 // pred_fallthru
    _
  // Predicated region
  $region10: #{gcn_forward.2} parent=0 // pred_check
    _
  $region11: #{gcn_forward.2} parent=0 // pred_check_branch
    %17 = sbr.rel (0) target = $region13
  $region12: #{gcn_forward.2} parent=0 // pred_region
    _
  $region13: #{gcn_forward.2} parent=0 // pred_fallthru
    _
  // Predicated region
  $region14: #{gcn_forward.2} parent=0 // pred_check
    _
  $region15: #{gcn_forward.2} parent=0 // pred_check_branch
    %19 = sbr.rel (0) target = $region17
  $region16: #{gcn_forward.2} parent=0 // pred_region
    _
  $region17: #{gcn_forward.2} parent=0 // pred_fallthru
    _
  // Predicated region
  $region18: #{gcn_forward.2} parent=0 // pred_check
    _
  $region19: #{gcn_forward.2} parent=0 // pred_check_branch
    %21 = sbr.rel (0) target = $region21
  $region20: #{gcn_forward.2} parent=0 // pred_region
    _
  $region21: #{gcn_forward.2} parent=0 // pred_fallthru
    _
  // Predicated region
  $region22: #{gcn_forward.2} parent=0 // pred_check
    _
  $region23: #{gcn_forward.2} parent=0 // pred_check_branch
    %23 = sbr.rel (0) target = $region25
  $region24: #{gcn_forward.2} parent=0 // pred_region
    _
  $region25: #{gcn_forward.2} parent=0 // pred_fallthru
    _
  // Predicated region
  $region26: #{gcn_forward.2} parent=0 // pred_check
    _
  $region27: #{gcn_forward.2} parent=0 // pred_check_branch
    %25 = sbr.rel (0) target = $region29
  $region28: #{gcn_forward.2} parent=0 // pred_region
    _
  $region29: #{gcn_forward.2} parent=0 // pred_fallthru
    _
  %p27 = scmp.eq.s32.totalorder 0, 0
  // Predicated region
  $region30: #{gcn_forward.2} parent=0 // pred_check
    %p28 = pneg %p27
  $region31: #{gcn_forward.2} parent=0 // pred_check_branch
    %30 = sbr.rel (%p28) target = $region33
  $region32: #{gcn_forward.2} parent=0 // pred_region
    %31 = vst [vmem:[#allocation2] sm:$0xff] 0.0
    %32 = vst [vmem:[#allocation2 + $0x8] sm:$0xff] 0.0
    %33 = vst [vmem:[#allocation2 + $0x10] sm:$0xff] 0.0
    %34 = vst [vmem:[#allocation2 + $0x18] sm:$0xff] 0.0
    %35 = vst [vmem:[#allocation2 + $0x20] sm:$0xff] 0.0
    %36 = vst [vmem:[#allocation2 + $0x28] sm:$0xff] 0.0
    %37 = vst [vmem:[#allocation2 + $0x30] sm:$0xff] 0.0
    %38 = vst [vmem:[#allocation2 + $0x38] sm:$0xff] 0.0
    %39 = vst [vmem:[#allocation2 + $0x40] sm:$0xff] 0.0
    %40 = vst [vmem:[#allocation2 + $0x48] sm:$0xff] 0.0
    %41 = vst [vmem:[#allocation2 + $0x50] sm:$0xff] 0.0
    %42 = vst [vmem:[#allocation2 + $0x58] sm:$0xff] 0.0
    %43 = vst [vmem:[#allocation2 + $0x60] sm:$0xff] 0.0
    %44 = vst [vmem:[#allocation2 + $0x68] sm:$0xff] 0.0
    %45 = vst [vmem:[#allocation2 + $0x70] sm:$0xff] 0.0
    %46 = vst [vmem:[#allocation2 + $0x78] sm:$0xff] 0.0
  $region33: #{gcn_forward.2} parent=0 // pred_fallthru
    _
  %v47 = vld [vmem:[#allocation2] sm:$0xff]
  %v48 = vld [vmem:[#allocation2 + $0x8] sm:$0xff]
  %v49 = vld [vmem:[#allocation2 + $0x10] sm:$0xff]
  %v50 = vld [vmem:[#allocation2 + $0x18] sm:$0xff]
  %v51 = vld [vmem:[#allocation2 + $0x20] sm:$0xff]
  %v52 = vld [vmem:[#allocation2 + $0x28] sm:$0xff]
  %v53 = vld [vmem:[#allocation2 + $0x30] sm:$0xff]
  %v54 = vld [vmem:[#allocation2 + $0x38] sm:$0xff]
  %v55 = vld [vmem:[#allocation2 + $0x40] sm:$0xff]
  %v56 = vld [vmem:[#allocation2 + $0x48] sm:$0xff]
  %v57 = vld [vmem:[#allocation2 + $0x50] sm:$0xff]
  %v58 = vld [vmem:[#allocation2 + $0x58] sm:$0xff]
  %v59 = vld [vmem:[#allocation2 + $0x60] sm:$0xff]
  %v60 = vld [vmem:[#allocation2 + $0x68] sm:$0xff]
  %v61 = vld [vmem:[#allocation2 + $0x70] sm:$0xff]
  %v62 = vld [vmem:[#allocation2 + $0x78] sm:$0xff]
  %v63 = vld [vmem:[%s0] sm:$0xf]
  %v64 = vld [vmem:[%s0 + $0x4] sm:$0xf]
  %v65 = vld [vmem:[%s0 + $0x8] sm:$0xf]
  %v66 = vld [vmem:[%s0 + $0xc] sm:$0xf]
  %v67 = vld [vmem:[%s0 + $0x10] sm:$0xf]
  %v68 = vld [vmem:[%s0 + $0x14] sm:$0xf]
  %v69 = vld [vmem:[%s0 + $0x18] sm:$0xf]
  %v70 = vld [vmem:[%s0 + $0x1c] sm:$0xf]
  %v71 = vld [vmem:[%s0 + $0x20] sm:$0xf]
  %v72 = vld [vmem:[%s0 + $0x24] sm:$0xf]
  %v73 = vld [vmem:[%s0 + $0x28] sm:$0xf]
  %v74 = vld [vmem:[%s0 + $0x2c] sm:$0xf]
  %v75 = vld [vmem:[%s0 + $0x30] sm:$0xf]
  %v76 = vld [vmem:[%s0 + $0x34] sm:$0xf]
  %v77 = vld [vmem:[%s0 + $0x38] sm:$0xf]
  %v78 = vld [vmem:[%s0 + $0x3c] sm:$0xf]
  %v79 = vld [vmem:[%s1] sm:$0xf]
  %v80 = vld [vmem:[%s1 + $0x4] sm:$0xf]
  %v81 = vld [vmem:[%s1 + $0x8] sm:$0xf]
  %v82 = vld [vmem:[%s1 + $0xc] sm:$0xf]
  %v83 = vld [vmem:[%s1 + $0x10] sm:$0xf]
  %v84 = vld [vmem:[%s1 + $0x14] sm:$0xf]
  %v85 = vld [vmem:[%s1 + $0x18] sm:$0xf]
  %v86 = vld [vmem:[%s1 + $0x1c] sm:$0xf]
  %v87 = vld [vmem:[%s1 + $0x20] sm:$0xf]
  %v88 = vld [vmem:[%s1 + $0x24] sm:$0xf]
  %v89 = vld [vmem:[%s1 + $0x28] sm:$0xf]
  %v90 = vld [vmem:[%s1 + $0x2c] sm:$0xf]
  %v91 = vld [vmem:[%s1 + $0x30] sm:$0xf]
  %v92 = vld [vmem:[%s1 + $0x34] sm:$0xf]
  %v93 = vld [vmem:[%s1 + $0x38] sm:$0xf]
  %v94 = vld [vmem:[%s1 + $0x3c] sm:$0xf]
  %v111 = vunpack.c.l.b16 %v63
  %v112 = vunpack.c.l.b16 %v64
  %v113 = vunpack.c.l.b16 %v65
  %v114 = vunpack.c.l.b16 %v66
  %v115 = vunpack.c.l.b16 %v67
  %v116 = vunpack.c.l.b16 %v68
  %v117 = vunpack.c.l.b16 %v69
  %v118 = vunpack.c.l.b16 %v70
  %v119 = vunpack.c.l.b16 %v71
  %v120 = vunpack.c.l.b16 %v72
  %v121 = vunpack.c.l.b16 %v73
  %v122 = vunpack.c.l.b16 %v74
  %v123 = vunpack.c.l.b16 %v75
  %v124 = vunpack.c.l.b16 %v76
  %v125 = vunpack.c.l.b16 %v77
  %v126 = vunpack.c.l.b16 %v78
  %v127 = vpack.c.b16 %v112, %v111
  %v128 = vpack.c.b16 %v114, %v113
  %v129 = vpack.c.b16 %v116, %v115
  %v130 = vpack.c.b16 %v118, %v117
  %v131 = vpack.c.b16 %v120, %v119
  %v132 = vpack.c.b16 %v122, %v121
  %v133 = vpack.c.b16 %v124, %v123
  %v134 = vpack.c.b16 %v126, %v125
  %v159 = vunpack.c.l.b16 %v79
  %v160 = vunpack.c.l.b16 %v80
  %v161 = vunpack.c.l.b16 %v81
  %v162 = vunpack.c.l.b16 %v82
  %v163 = vunpack.c.l.b16 %v83
  %v164 = vunpack.c.l.b16 %v84
  %v165 = vunpack.c.l.b16 %v85
  %v166 = vunpack.c.l.b16 %v86
  %v167 = vunpack.c.l.b16 %v87
  %v168 = vunpack.c.l.b16 %v88
  %v169 = vunpack.c.l.b16 %v89
  %v170 = vunpack.c.l.b16 %v90
  %v171 = vunpack.c.l.b16 %v91
  %v172 = vunpack.c.l.b16 %v92
  %v173 = vunpack.c.l.b16 %v93
  %v174 = vunpack.c.l.b16 %v94
  %v175 = vpack.c.b16 %v160, %v159
  %v176 = vpack.c.b16 %v162, %v161
  %v177 = vpack.c.b16 %v164, %v163
  %v178 = vpack.c.b16 %v166, %v165
  %v179 = vpack.c.b16 %v168, %v167
  %v180 = vpack.c.b16 %v170, %v169
  %v181 = vpack.c.b16 %v172, %v171
  %v182 = vpack.c.b16 %v174, %v173
  %191 = vmatprep.subr.bf16.mxu0 0
  %192 = vmatpush1.bf16.msra.mxu0 %v182
  %193 = vmatprep.subr.bf16.mxu0 0
  %194 = vmatpush1.bf16.msra.mxu0 %v181
  %195 = vmatprep.subr.bf16.mxu0 0
  %196 = vmatpush1.bf16.msra.mxu0 %v180
  %197 = vmatprep.subr.bf16.mxu0 0
  %198 = vmatpush1.bf16.msra.mxu0 %v179
  %199 = vmatprep.subr.bf16.mxu0 0
  %200 = vmatpush1.bf16.msra.mxu0 %v178
  %201 = vmatprep.subr.bf16.mxu0 0
  %202 = vmatpush1.bf16.msra.mxu0 %v177
  %203 = vmatprep.subr.bf16.mxu0 0
  %204 = vmatpush1.bf16.msra.mxu0 %v176
  %205 = vmatprep.subr.bf16.mxu0 0
  %206 = vmatpush1.bf16.msra.mxu0 %v175
  %207 = vmatprep.subr.bf16.mxu0 0
  %208 = vmatpush2.bf16.msra.mxu0 0
  %209 = vmatprep.subr.bf16.mxu0 0
  %210 = vmatpush2.bf16.msra.mxu0 0
  %211 = vmatprep.subr.bf16.mxu0 0
  %212 = vmatpush2.bf16.msra.mxu0 0
  %213 = vmatprep.subr.bf16.mxu0 0
  %214 = vmatpush2.bf16.msra.mxu0 0
  %215 = vmatprep.subr.bf16.mxu0 0
  %216 = vmatpush2.bf16.msra.mxu0 0
  %217 = vmatprep.subr.bf16.mxu0 0
  %218 = vmatpush2.bf16.msra.mxu0 0
  %219 = vmatprep.subr.bf16.mxu0 0
  %220 = vmatpush2.bf16.msra.mxu0 0
  %221 = vmatprep.subr.bf16.mxu0 0
  %222 = vmatpush2.bf16.msra.mxu0 0
  %223 = vmatprep.mubr.bf16.mxu0 0
  %224 = vmatmul.mubr.bf16.gmra.mxu0 %v127
  %v225 = vpop.f32.mrf.mxu0
  %v226 = vadd.f32 0.0, %v225
  %v227 = vpop.f32.mrf.mxu0
  %v228 = vpop.f32.mrf.mxu0
  %v229 = vadd.f32 0.0, %v228
  %v230 = vpop.f32.mrf.mxu0
  %231 = vmatprep.mubr.bf16.mxu0 0
  %232 = vmatmul.mubr.bf16.gmra.mxu0 %v128
  %v233 = vpop.f32.mrf.mxu0
  %v234 = vadd.f32 0.0, %v233
  %v235 = vpop.f32.mrf.mxu0
  %v236 = vpop.f32.mrf.mxu0
  %v237 = vadd.f32 0.0, %v236
  %v238 = vpop.f32.mrf.mxu0
  %239 = vmatprep.mubr.bf16.mxu0 0
  %240 = vmatmul.mubr.bf16.gmra.mxu0 %v129
  %v241 = vpop.f32.mrf.mxu0
  %v242 = vadd.f32 0.0, %v241
  %v243 = vpop.f32.mrf.mxu0
  %v244 = vpop.f32.mrf.mxu0
  %v245 = vadd.f32 0.0, %v244
  %v246 = vpop.f32.mrf.mxu0
  %247 = vmatprep.mubr.bf16.mxu0 0
  %248 = vmatmul.mubr.bf16.gmra.mxu0 %v130
  %v249 = vpop.f32.mrf.mxu0
  %v250 = vadd.f32 0.0, %v249
  %v251 = vpop.f32.mrf.mxu0
  %v252 = vpop.f32.mrf.mxu0
  %v253 = vadd.f32 0.0, %v252
  %v254 = vpop.f32.mrf.mxu0
  %255 = vmatprep.mubr.bf16.mxu0 0
  %256 = vmatmul.mubr.bf16.gmra.mxu0 %v131
  %v257 = vpop.f32.mrf.mxu0
  %v258 = vadd.f32 0.0, %v257
  %v259 = vpop.f32.mrf.mxu0
  %v260 = vpop.f32.mrf.mxu0
  %v261 = vadd.f32 0.0, %v260
  %v262 = vpop.f32.mrf.mxu0
  %263 = vmatprep.mubr.bf16.mxu0 0
  %264 = vmatmul.mubr.bf16.gmra.mxu0 %v132
  %v265 = vpop.f32.mrf.mxu0
  %v266 = vadd.f32 0.0, %v265
  %v267 = vpop.f32.mrf.mxu0
  %v268 = vpop.f32.mrf.mxu0
  %v269 = vadd.f32 0.0, %v268
  %v270 = vpop.f32.mrf.mxu0
  %271 = vmatprep.mubr.bf16.mxu0 0
  %272 = vmatmul.mubr.bf16.gmra.mxu0 %v133
  %v273 = vpop.f32.mrf.mxu0
  %v274 = vadd.f32 0.0, %v273
  %v275 = vpop.f32.mrf.mxu0
  %v276 = vpop.f32.mrf.mxu0
  %v277 = vadd.f32 0.0, %v276
  %v278 = vpop.f32.mrf.mxu0
  %279 = vmatprep.mubr.bf16.mxu0 0
  %280 = vmatmul.mubr.bf16.gmra.mxu0 %v134
  %v281 = vpop.f32.mrf.mxu0
  %v282 = vadd.f32 0.0, %v281
  %v283 = vpop.f32.mrf.mxu0
  %v284 = vpop.f32.mrf.mxu0
  %v285 = vadd.f32 0.0, %v284
  %v286 = vpop.f32.mrf.mxu0
  %287 = vdwg.mxu0
  %v288 = vadd.f32 %v47, %v226
  %v289 = vadd.f32 %v48, %v229
  %v290 = vadd.f32 %v49, %v234
  %v291 = vadd.f32 %v50, %v237
  %v292 = vadd.f32 %v51, %v242
  %v293 = vadd.f32 %v52, %v245
  %v294 = vadd.f32 %v53, %v250
  %v295 = vadd.f32 %v54, %v253
  %v296 = vadd.f32 %v55, %v258
  %v297 = vadd.f32 %v56, %v261
  %v298 = vadd.f32 %v57, %v266
  %v299 = vadd.f32 %v58, %v269
  %v300 = vadd.f32 %v59, %v274
  %v301 = vadd.f32 %v60, %v277
  %v302 = vadd.f32 %v61, %v282
  %v303 = vadd.f32 %v62, %v285
  %304 = vst [vmem:[#allocation2] sm:$0xff] %v288
  %305 = vst [vmem:[#allocation2 + $0x8] sm:$0xff] %v289
  %306 = vst [vmem:[#allocation2 + $0x10] sm:$0xff] %v290
  %307 = vst [vmem:[#allocation2 + $0x18] sm:$0xff] %v291
  %308 = vst [vmem:[#allocation2 + $0x20] sm:$0xff] %v292
  %309 = vst [vmem:[#allocation2 + $0x28] sm:$0xff] %v293
  %310 = vst [vmem:[#allocation2 + $0x30] sm:$0xff] %v294
  %311 = vst [vmem:[#allocation2 + $0x38] sm:$0xff] %v295
  %312 = vst [vmem:[#allocation2 + $0x40] sm:$0xff] %v296
  %313 = vst [vmem:[#allocation2 + $0x48] sm:$0xff] %v297
  %314 = vst [vmem:[#allocation2 + $0x50] sm:$0xff] %v298
  %315 = vst [vmem:[#allocation2 + $0x58] sm:$0xff] %v299
  %316 = vst [vmem:[#allocation2 + $0x60] sm:$0xff] %v300
  %317 = vst [vmem:[#allocation2 + $0x68] sm:$0xff] %v301
  %318 = vst [vmem:[#allocation2 + $0x70] sm:$0xff] %v302
  %319 = vst [vmem:[#allocation2 + $0x78] sm:$0xff] %v303
  // Predicated region
  $region34: #{gcn_forward.2} parent=0 // pred_check
    %p320 = pneg %p27
  $region35: #{gcn_forward.2} parent=0 // pred_check_branch
    %322 = sbr.rel (%p320) target = $region37
  $region36: #{gcn_forward.2} parent=0 // pred_region
    %v323 = vld [vmem:[#allocation2] sm:$0xff]
    %v324 = vld [vmem:[#allocation2 + $0x8] sm:$0xff]
    %v325 = vld [vmem:[#allocation2 + $0x10] sm:$0xff]
    %v326 = vld [vmem:[#allocation2 + $0x18] sm:$0xff]
    %v327 = vld [vmem:[#allocation2 + $0x20] sm:$0xff]
    %v328 = vld [vmem:[#allocation2 + $0x28] sm:$0xff]
    %v329 = vld [vmem:[#allocation2 + $0x30] sm:$0xff]
    %v330 = vld [vmem:[#allocation2 + $0x38] sm:$0xff]
    %v331 = vld [vmem:[#allocation2 + $0x40] sm:$0xff]
    %v332 = vld [vmem:[#allocation2 + $0x48] sm:$0xff]
    %v333 = vld [vmem:[#allocation2 + $0x50] sm:$0xff]
    %v334 = vld [vmem:[#allocation2 + $0x58] sm:$0xff]
    %v335 = vld [vmem:[#allocation2 + $0x60] sm:$0xff]
    %v336 = vld [vmem:[#allocation2 + $0x68] sm:$0xff]
    %v337 = vld [vmem:[#allocation2 + $0x70] sm:$0xff]
    %v338 = vld [vmem:[#allocation2 + $0x78] sm:$0xff]
    %v339 = vld [vmem:[%s2] sm:$0xff]
    %v340 = vld [vmem:[%s2 + $0x8] sm:$0xff]
    %v341 = vld [vmem:[%s2 + $0x10] sm:$0xff]
    %v342 = vld [vmem:[%s2 + $0x18] sm:$0xff]
    %v343 = vld [vmem:[%s2 + $0x20] sm:$0xff]
    %v344 = vld [vmem:[%s2 + $0x28] sm:$0xff]
    %v345 = vld [vmem:[%s2 + $0x30] sm:$0xff]
    %v346 = vld [vmem:[%s2 + $0x38] sm:$0xff]
    %v347 = vld [vmem:[%s2 + $0x40] sm:$0xff]
    %v348 = vld [vmem:[%s2 + $0x48] sm:$0xff]
    %v349 = vld [vmem:[%s2 + $0x50] sm:$0xff]
    %v350 = vld [vmem:[%s2 + $0x58] sm:$0xff]
    %v351 = vld [vmem:[%s2 + $0x60] sm:$0xff]
    %v352 = vld [vmem:[%s2 + $0x68] sm:$0xff]
    %v353 = vld [vmem:[%s2 + $0x70] sm:$0xff]
    %v354 = vld [vmem:[%s2 + $0x78] sm:$0xff]
    %356 = vset.pattern.permute.xlu0 0
    %357 = vperm.xlu0 %356, %v339
    %v358 = vpop.permute.xlu0 %357
    %361 = vset.pattern.permute.xlu0 0
    %362 = vperm.xlu0 %361, %v340
    %v363 = vpop.permute.xlu0 %362
    %366 = vset.pattern.permute.xlu0 0
    %367 = vperm.xlu0 %366, %v341
    %v368 = vpop.permute.xlu0 %367
    %371 = vset.pattern.permute.xlu0 0
    %372 = vperm.xlu0 %371, %v342
    %v373 = vpop.permute.xlu0 %372
    %376 = vset.pattern.permute.xlu0 0
    %377 = vperm.xlu0 %376, %v343
    %v378 = vpop.permute.xlu0 %377
    %381 = vset.pattern.permute.xlu0 0
    %382 = vperm.xlu0 %381, %v344
    %v383 = vpop.permute.xlu0 %382
    %386 = vset.pattern.permute.xlu0 0
    %387 = vperm.xlu0 %386, %v345
    %v388 = vpop.permute.xlu0 %387
    %391 = vset.pattern.permute.xlu0 0
    %392 = vperm.xlu0 %391, %v346
    %v393 = vpop.permute.xlu0 %392
    %396 = vset.pattern.permute.xlu0 0
    %397 = vperm.xlu0 %396, %v347
    %v398 = vpop.permute.xlu0 %397
    %401 = vset.pattern.permute.xlu0 0
    %402 = vperm.xlu0 %401, %v348
    %v403 = vpop.permute.xlu0 %402
    %406 = vset.pattern.permute.xlu0 0
    %407 = vperm.xlu0 %406, %v349
    %v408 = vpop.permute.xlu0 %407
    %411 = vset.pattern.permute.xlu0 0
    %412 = vperm.xlu0 %411, %v350
    %v413 = vpop.permute.xlu0 %412
    %416 = vset.pattern.permute.xlu0 0
    %417 = vperm.xlu0 %416, %v351
    %v418 = vpop.permute.xlu0 %417
    %421 = vset.pattern.permute.xlu0 0
    %422 = vperm.xlu0 %421, %v352
    %v423 = vpop.permute.xlu0 %422
    %426 = vset.pattern.permute.xlu0 0
    %427 = vperm.xlu0 %426, %v353
    %v428 = vpop.permute.xlu0 %427
    %431 = vset.pattern.permute.xlu0 0
    %432 = vperm.xlu0 %431, %v354
    %v433 = vpop.permute.xlu0 %432
    %v435 = vmul.f32 %v323, %v358
    %v436 = vmul.f32 %v324, %v363
    %v437 = vmul.f32 %v325, %v368
    %v438 = vmul.f32 %v326, %v373
    %v439 = vmul.f32 %v327, %v378
    %v440 = vmul.f32 %v328, %v383
    %v441 = vmul.f32 %v329, %v388
    %v442 = vmul.f32 %v330, %v393
    %v443 = vmul.f32 %v331, %v398
    %v444 = vmul.f32 %v332, %v403
    %v445 = vmul.f32 %v333, %v408
    %v446 = vmul.f32 %v334, %v413
    %v447 = vmul.f32 %v335, %v418
    %v448 = vmul.f32 %v336, %v423
    %v449 = vmul.f32 %v337, %v428
    %v450 = vmul.f32 %v338, %v433
    %v451 = vld [vmem:[%s4] sm:$0xff]
    %v452 = vld [vmem:[%s4 + $0x8] sm:$0xff]
    %v453 = vld [vmem:[%s4 + $0x10] sm:$0xff]
    %v454 = vld [vmem:[%s4 + $0x18] sm:$0xff]
    %v455 = vld [vmem:[%s4 + $0x20] sm:$0xff]
    %v456 = vld [vmem:[%s4 + $0x28] sm:$0xff]
    %v457 = vld [vmem:[%s4 + $0x30] sm:$0xff]
    %v458 = vld [vmem:[%s4 + $0x38] sm:$0xff]
    %v459 = vld [vmem:[%s4 + $0x40] sm:$0xff]
    %v460 = vld [vmem:[%s4 + $0x48] sm:$0xff]
    %v461 = vld [vmem:[%s4 + $0x50] sm:$0xff]
    %v462 = vld [vmem:[%s4 + $0x58] sm:$0xff]
    %v463 = vld [vmem:[%s4 + $0x60] sm:$0xff]
    %v464 = vld [vmem:[%s4 + $0x68] sm:$0xff]
    %v465 = vld [vmem:[%s4 + $0x70] sm:$0xff]
    %v466 = vld [vmem:[%s4 + $0x78] sm:$0xff]
    %v467 = vld [vmem:[%s5] sm:$0x1]
    %v469 = vlaneseq
    %v470 = vshrl.u32 %v469, 7
    %v471 = vsub.s32 0, %v470
    %v472 = vrot.slane %v467, %v471
    %474 = vmatprep.subr.mxu0 0.0
    %475 = vmatpush1.msra.mxu0 %v466
    %476 = vmatprep.subr.mxu0 0.0
    %477 = vmatpush1.msra.mxu0 %v465
    %478 = vmatprep.subr.mxu0 0.0
    %479 = vmatpush1.msra.mxu0 %v464
    %480 = vmatprep.subr.mxu0 0.0
    %481 = vmatpush1.msra.mxu0 %v463
    %482 = vmatprep.subr.mxu0 0.0
    %483 = vmatpush1.msra.mxu0 %v462
    %484 = vmatprep.subr.mxu0 0.0
    %485 = vmatpush1.msra.mxu0 %v461
    %486 = vmatprep.subr.mxu0 0.0
    %487 = vmatpush1.msra.mxu0 %v460
    %488 = vmatprep.subr.mxu0 0.0
    %489 = vmatpush1.msra.mxu0 %v459
    %490 = vmatprep.subr.mxu0 0.0
    %491 = vmatpush1.msra.mxu0 %v458
    %492 = vmatprep.subr.mxu0 0.0
    %493 = vmatpush1.msra.mxu0 %v457
    %494 = vmatprep.subr.mxu0 0.0
    %495 = vmatpush1.msra.mxu0 %v456
    %496 = vmatprep.subr.mxu0 0.0
    %497 = vmatpush1.msra.mxu0 %v455
    %498 = vmatprep.subr.mxu0 0.0
    %499 = vmatpush1.msra.mxu0 %v454
    %500 = vmatprep.subr.mxu0 0.0
    %501 = vmatpush1.msra.mxu0 %v453
    %502 = vmatprep.subr.mxu0 0.0
    %503 = vmatpush1.msra.mxu0 %v452
    %504 = vmatprep.subr.mxu0 0.0
    %505 = vmatpush1.msra.mxu0 %v451
    %506 = vmatprep.subr.mxu0 0.0
    %507 = vmatpush2.msra.mxu0 0.0
    %508 = vmatprep.subr.mxu0 0.0
    %509 = vmatpush2.msra.mxu0 0.0
    %510 = vmatprep.subr.mxu0 0.0
    %511 = vmatpush2.msra.mxu0 0.0
    %512 = vmatprep.subr.mxu0 0.0
    %513 = vmatpush2.msra.mxu0 0.0
    %514 = vmatprep.subr.mxu0 0.0
    %515 = vmatpush2.msra.mxu0 0.0
    %516 = vmatprep.subr.mxu0 0.0
    %517 = vmatpush2.msra.mxu0 0.0
    %518 = vmatprep.subr.mxu0 0.0
    %519 = vmatpush2.msra.mxu0 0.0
    %520 = vmatprep.subr.mxu0 0.0
    %521 = vmatpush2.msra.mxu0 0.0
    %522 = vmatprep.subr.mxu0 0.0
    %523 = vmatpush2.msra.mxu0 0.0
    %524 = vmatprep.subr.mxu0 0.0
    %525 = vmatpush2.msra.mxu0 0.0
    %526 = vmatprep.subr.mxu0 0.0
    %527 = vmatpush2.msra.mxu0 0.0
    %528 = vmatprep.subr.mxu0 0.0
    %529 = vmatpush2.msra.mxu0 0.0
    %530 = vmatprep.subr.mxu0 0.0
    %531 = vmatpush2.msra.mxu0 0.0
    %532 = vmatprep.subr.mxu0 0.0
    %533 = vmatpush2.msra.mxu0 0.0
    %534 = vmatprep.subr.mxu0 0.0
    %535 = vmatpush2.msra.mxu0 0.0
    %536 = vmatprep.subr.mxu0 0.0
    %537 = vmatpush2.msra.mxu0 0.0
    %538 = vmatprep.mubr.f32.mxu0 0.0
    %539 = vmatmul.mubr.f32.gmra.mxu0 %v435
    %v540 = vpop.f32.mrf.mxu0
    %v541 = vadd.f32 %v472, %v540
    %v542 = vpop.f32.mrf.mxu0
    %543 = vmatprep.mubr.f32.mxu0 0.0
    %544 = vmatmul.mubr.f32.gmra.mxu0 %v436
    %v545 = vpop.f32.mrf.mxu0
    %v546 = vadd.f32 %v472, %v545
    %v547 = vpop.f32.mrf.mxu0
    %548 = vmatprep.mubr.f32.mxu0 0.0
    %549 = vmatmul.mubr.f32.gmra.mxu0 %v437
    %v550 = vpop.f32.mrf.mxu0
    %v551 = vadd.f32 %v472, %v550
    %v552 = vpop.f32.mrf.mxu0
    %553 = vmatprep.mubr.f32.mxu0 0.0
    %554 = vmatmul.mubr.f32.gmra.mxu0 %v438
    %v555 = vpop.f32.mrf.mxu0
    %v556 = vadd.f32 %v472, %v555
    %v557 = vpop.f32.mrf.mxu0
    %558 = vmatprep.mubr.f32.mxu0 0.0
    %559 = vmatmul.mubr.f32.gmra.mxu0 %v439
    %v560 = vpop.f32.mrf.mxu0
    %v561 = vadd.f32 %v472, %v560
    %v562 = vpop.f32.mrf.mxu0
    %563 = vmatprep.mubr.f32.mxu0 0.0
    %564 = vmatmul.mubr.f32.gmra.mxu0 %v440
    %v565 = vpop.f32.mrf.mxu0
    %v566 = vadd.f32 %v472, %v565
    %v567 = vpop.f32.mrf.mxu0
    %568 = vmatprep.mubr.f32.mxu0 0.0
    %569 = vmatmul.mubr.f32.gmra.mxu0 %v441
    %v570 = vpop.f32.mrf.mxu0
    %v571 = vadd.f32 %v472, %v570
    %v572 = vpop.f32.mrf.mxu0
    %573 = vmatprep.mubr.f32.mxu0 0.0
    %574 = vmatmul.mubr.f32.gmra.mxu0 %v442
    %v575 = vpop.f32.mrf.mxu0
    %v576 = vadd.f32 %v472, %v575
    %v577 = vpop.f32.mrf.mxu0
    %578 = vmatprep.mubr.f32.mxu0 0.0
    %579 = vmatmul.mubr.f32.gmra.mxu0 %v443
    %v580 = vpop.f32.mrf.mxu0
    %v581 = vadd.f32 %v472, %v580
    %v582 = vpop.f32.mrf.mxu0
    %583 = vmatprep.mubr.f32.mxu0 0.0
    %584 = vmatmul.mubr.f32.gmra.mxu0 %v444
    %v585 = vpop.f32.mrf.mxu0
    %v586 = vadd.f32 %v472, %v585
    %v587 = vpop.f32.mrf.mxu0
    %588 = vmatprep.mubr.f32.mxu0 0.0
    %589 = vmatmul.mubr.f32.gmra.mxu0 %v445
    %v590 = vpop.f32.mrf.mxu0
    %v591 = vadd.f32 %v472, %v590
    %v592 = vpop.f32.mrf.mxu0
    %593 = vmatprep.mubr.f32.mxu0 0.0
    %594 = vmatmul.mubr.f32.gmra.mxu0 %v446
    %v595 = vpop.f32.mrf.mxu0
    %v596 = vadd.f32 %v472, %v595
    %v597 = vpop.f32.mrf.mxu0
    %598 = vmatprep.mubr.f32.mxu0 0.0
    %599 = vmatmul.mubr.f32.gmra.mxu0 %v447
    %v600 = vpop.f32.mrf.mxu0
    %v601 = vadd.f32 %v472, %v600
    %v602 = vpop.f32.mrf.mxu0
    %603 = vmatprep.mubr.f32.mxu0 0.0
    %604 = vmatmul.mubr.f32.gmra.mxu0 %v448
    %v605 = vpop.f32.mrf.mxu0
    %v606 = vadd.f32 %v472, %v605
    %v607 = vpop.f32.mrf.mxu0
    %608 = vmatprep.mubr.f32.mxu0 0.0
    %609 = vmatmul.mubr.f32.gmra.mxu0 %v449
    %v610 = vpop.f32.mrf.mxu0
    %v611 = vadd.f32 %v472, %v610
    %v612 = vpop.f32.mrf.mxu0
    %613 = vmatprep.mubr.f32.mxu0 0.0
    %614 = vmatmul.mubr.f32.gmra.mxu0 %v450
    %v615 = vpop.f32.mrf.mxu0
    %v616 = vadd.f32 %v472, %v615
    %v617 = vpop.f32.mrf.mxu0
    %618 = vdwg.mxu0
    %v619 = vmax.f32 %v541, 0.0
    %v620 = vmax.f32 %v546, 0.0
    %v621 = vmax.f32 %v551, 0.0
    %v622 = vmax.f32 %v556, 0.0
    %v623 = vmax.f32 %v561, 0.0
    %v624 = vmax.f32 %v566, 0.0
    %v625 = vmax.f32 %v571, 0.0
    %v626 = vmax.f32 %v576, 0.0
    %v627 = vmax.f32 %v581, 0.0
    %v628 = vmax.f32 %v586, 0.0
    %v629 = vmax.f32 %v591, 0.0
    %v630 = vmax.f32 %v596, 0.0
    %v631 = vmax.f32 %v601, 0.0
    %v632 = vmax.f32 %v606, 0.0
    %v633 = vmax.f32 %v611, 0.0
    %v634 = vmax.f32 %v616, 0.0
    %v635 = vld [vmem:[%s6] sm:$0xff]
    %v636 = vld [vmem:[%s6 + $0x8] sm:$0xff]
    %v637 = vld [vmem:[%s6 + $0x10] sm:$0xff]
    %v638 = vld [vmem:[%s6 + $0x18] sm:$0xff]
    %v639 = vld [vmem:[%s6 + $0x20] sm:$0xff]
    %v640 = vld [vmem:[%s6 + $0x28] sm:$0xff]
    %v641 = vld [vmem:[%s6 + $0x30] sm:$0xff]
    %v642 = vld [vmem:[%s6 + $0x38] sm:$0xff]
    %v643 = vld [vmem:[%s6 + $0x40] sm:$0xff]
    %v644 = vld [vmem:[%s6 + $0x48] sm:$0xff]
    %v645 = vld [vmem:[%s6 + $0x50] sm:$0xff]
    %v646 = vld [vmem:[%s6 + $0x58] sm:$0xff]
    %v647 = vld [vmem:[%s6 + $0x60] sm:$0xff]
    %v648 = vld [vmem:[%s6 + $0x68] sm:$0xff]
    %v649 = vld [vmem:[%s6 + $0x70] sm:$0xff]
    %v650 = vld [vmem:[%s6 + $0x78] sm:$0xff]
    %651 = vmatprep.subr.mxu0 0.0
    %652 = vmatpush1.msra.mxu0 %v650
    %653 = vmatprep.subr.mxu0 0.0
    %654 = vmatpush1.msra.mxu0 %v649
    %655 = vmatprep.subr.mxu0 0.0
    %656 = vmatpush1.msra.mxu0 %v648
    %657 = vmatprep.subr.mxu0 0.0
    %658 = vmatpush1.msra.mxu0 %v647
    %659 = vmatprep.subr.mxu0 0.0
    %660 = vmatpush1.msra.mxu0 %v646
    %661 = vmatprep.subr.mxu0 0.0
    %662 = vmatpush1.msra.mxu0 %v645
    %663 = vmatprep.subr.mxu0 0.0
    %664 = vmatpush1.msra.mxu0 %v644
    %665 = vmatprep.subr.mxu0 0.0
    %666 = vmatpush1.msra.mxu0 %v643
    %667 = vmatprep.subr.mxu0 0.0
    %668 = vmatpush1.msra.mxu0 %v642
    %669 = vmatprep.subr.mxu0 0.0
    %670 = vmatpush1.msra.mxu0 %v641
    %671 = vmatprep.subr.mxu0 0.0
    %672 = vmatpush1.msra.mxu0 %v640
    %673 = vmatprep.subr.mxu0 0.0
    %674 = vmatpush1.msra.mxu0 %v639
    %675 = vmatprep.subr.mxu0 0.0
    %676 = vmatpush1.msra.mxu0 %v638
    %677 = vmatprep.subr.mxu0 0.0
    %678 = vmatpush1.msra.mxu0 %v637
    %679 = vmatprep.subr.mxu0 0.0
    %680 = vmatpush1.msra.mxu0 %v636
    %681 = vmatprep.subr.mxu0 0.0
    %682 = vmatpush1.msra.mxu0 %v635
    %683 = vmatprep.subr.mxu0 0.0
    %684 = vmatpush2.msra.mxu0 0.0
    %685 = vmatprep.subr.mxu0 0.0
    %686 = vmatpush2.msra.mxu0 0.0
    %687 = vmatprep.subr.mxu0 0.0
    %688 = vmatpush2.msra.mxu0 0.0
    %689 = vmatprep.subr.mxu0 0.0
    %690 = vmatpush2.msra.mxu0 0.0
    %691 = vmatprep.subr.mxu0 0.0
    %692 = vmatpush2.msra.mxu0 0.0
    %693 = vmatprep.subr.mxu0 0.0
    %694 = vmatpush2.msra.mxu0 0.0
    %695 = vmatprep.subr.mxu0 0.0
    %696 = vmatpush2.msra.mxu0 0.0
    %697 = vmatprep.subr.mxu0 0.0
    %698 = vmatpush2.msra.mxu0 0.0
    %699 = vmatprep.subr.mxu0 0.0
    %700 = vmatpush2.msra.mxu0 0.0
    %701 = vmatprep.subr.mxu0 0.0
    %702 = vmatpush2.msra.mxu0 0.0
    %703 = vmatprep.subr.mxu0 0.0
    %704 = vmatpush2.msra.mxu0 0.0
    %705 = vmatprep.subr.mxu0 0.0
    %706 = vmatpush2.msra.mxu0 0.0
    %707 = vmatprep.subr.mxu0 0.0
    %708 = vmatpush2.msra.mxu0 0.0
    %709 = vmatprep.subr.mxu0 0.0
    %710 = vmatpush2.msra.mxu0 0.0
    %711 = vmatprep.subr.mxu0 0.0
    %712 = vmatpush2.msra.mxu0 0.0
    %713 = vmatprep.subr.mxu0 0.0
    %714 = vmatpush2.msra.mxu0 0.0
    %715 = vmatprep.mubr.f32.mxu0 0.0
    %716 = vmatmul.mubr.f32.gmra.mxu0 %v619
    %v717 = vpop.f32.mrf.mxu0
    %v718 = vadd.f32 0.0, %v717
    %v719 = vpop.f32.mrf.mxu0
    %720 = vmatprep.mubr.f32.mxu0 0.0
    %721 = vmatmul.mubr.f32.gmra.mxu0 %v620
    %v722 = vpop.f32.mrf.mxu0
    %v723 = vadd.f32 0.0, %v722
    %v724 = vpop.f32.mrf.mxu0
    %725 = vmatprep.mubr.f32.mxu0 0.0
    %726 = vmatmul.mubr.f32.gmra.mxu0 %v621
    %v727 = vpop.f32.mrf.mxu0
    %v728 = vadd.f32 0.0, %v727
    %v729 = vpop.f32.mrf.mxu0
    %730 = vmatprep.mubr.f32.mxu0 0.0
    %731 = vmatmul.mubr.f32.gmra.mxu0 %v622
    %v732 = vpop.f32.mrf.mxu0
    %v733 = vadd.f32 0.0, %v732
    %v734 = vpop.f32.mrf.mxu0
    %735 = vmatprep.mubr.f32.mxu0 0.0
    %736 = vmatmul.mubr.f32.gmra.mxu0 %v623
    %v737 = vpop.f32.mrf.mxu0
    %v738 = vadd.f32 0.0, %v737
    %v739 = vpop.f32.mrf.mxu0
    %740 = vmatprep.mubr.f32.mxu0 0.0
    %741 = vmatmul.mubr.f32.gmra.mxu0 %v624
    %v742 = vpop.f32.mrf.mxu0
    %v743 = vadd.f32 0.0, %v742
    %v744 = vpop.f32.mrf.mxu0
    %745 = vmatprep.mubr.f32.mxu0 0.0
    %746 = vmatmul.mubr.f32.gmra.mxu0 %v625
    %v747 = vpop.f32.mrf.mxu0
    %v748 = vadd.f32 0.0, %v747
    %v749 = vpop.f32.mrf.mxu0
    %750 = vmatprep.mubr.f32.mxu0 0.0
    %751 = vmatmul.mubr.f32.gmra.mxu0 %v626
    %v752 = vpop.f32.mrf.mxu0
    %v753 = vadd.f32 0.0, %v752
    %v754 = vpop.f32.mrf.mxu0
    %755 = vmatprep.mubr.f32.mxu0 0.0
    %756 = vmatmul.mubr.f32.gmra.mxu0 %v627
    %v757 = vpop.f32.mrf.mxu0
    %v758 = vadd.f32 0.0, %v757
    %v759 = vpop.f32.mrf.mxu0
    %760 = vmatprep.mubr.f32.mxu0 0.0
    %761 = vmatmul.mubr.f32.gmra.mxu0 %v628
    %v762 = vpop.f32.mrf.mxu0
    %v763 = vadd.f32 0.0, %v762
    %v764 = vpop.f32.mrf.mxu0
    %765 = vmatprep.mubr.f32.mxu0 0.0
    %766 = vmatmul.mubr.f32.gmra.mxu0 %v629
    %v767 = vpop.f32.mrf.mxu0
    %v768 = vadd.f32 0.0, %v767
    %v769 = vpop.f32.mrf.mxu0
    %770 = vmatprep.mubr.f32.mxu0 0.0
    %771 = vmatmul.mubr.f32.gmra.mxu0 %v630
    %v772 = vpop.f32.mrf.mxu0
    %v773 = vadd.f32 0.0, %v772
    %v774 = vpop.f32.mrf.mxu0
    %775 = vmatprep.mubr.f32.mxu0 0.0
    %776 = vmatmul.mubr.f32.gmra.mxu0 %v631
    %v777 = vpop.f32.mrf.mxu0
    %v778 = vadd.f32 0.0, %v777
    %v779 = vpop.f32.mrf.mxu0
    %780 = vmatprep.mubr.f32.mxu0 0.0
    %781 = vmatmul.mubr.f32.gmra.mxu0 %v632
    %v782 = vpop.f32.mrf.mxu0
    %v783 = vadd.f32 0.0, %v782
    %v784 = vpop.f32.mrf.mxu0
    %785 = vmatprep.mubr.f32.mxu0 0.0
    %786 = vmatmul.mubr.f32.gmra.mxu0 %v633
    %v787 = vpop.f32.mrf.mxu0
    %v788 = vadd.f32 0.0, %v787
    %v789 = vpop.f32.mrf.mxu0
    %790 = vmatprep.mubr.f32.mxu0 0.0
    %791 = vmatmul.mubr.f32.gmra.mxu0 %v634
    %v792 = vpop.f32.mrf.mxu0
    %v793 = vadd.f32 0.0, %v792
    %v794 = vpop.f32.mrf.mxu0
    %795 = vdwg.mxu0
    %v796 = vld [vmem:[%s3] sm:$0xff]
    %v797 = vld [vmem:[%s3 + $0x8] sm:$0xff]
    %v798 = vld [vmem:[%s3 + $0x10] sm:$0xff]
    %v799 = vld [vmem:[%s3 + $0x18] sm:$0xff]
    %v800 = vld [vmem:[%s3 + $0x20] sm:$0xff]
    %v801 = vld [vmem:[%s3 + $0x28] sm:$0xff]
    %v802 = vld [vmem:[%s3 + $0x30] sm:$0xff]
    %v803 = vld [vmem:[%s3 + $0x38] sm:$0xff]
    %v804 = vld [vmem:[%s3 + $0x40] sm:$0xff]
    %v805 = vld [vmem:[%s3 + $0x48] sm:$0xff]
    %v806 = vld [vmem:[%s3 + $0x50] sm:$0xff]
    %v807 = vld [vmem:[%s3 + $0x58] sm:$0xff]
    %v808 = vld [vmem:[%s3 + $0x60] sm:$0xff]
    %v809 = vld [vmem:[%s3 + $0x68] sm:$0xff]
    %v810 = vld [vmem:[%s3 + $0x70] sm:$0xff]
    %v811 = vld [vmem:[%s3 + $0x78] sm:$0xff]
    %813 = vset.pattern.permute.xlu0 0
    %814 = vperm.xlu0 %813, %v796
    %v815 = vpop.permute.xlu0 %814
    %818 = vset.pattern.permute.xlu0 0
    %819 = vperm.xlu0 %818, %v797
    %v820 = vpop.permute.xlu0 %819
    %823 = vset.pattern.permute.xlu0 0
    %824 = vperm.xlu0 %823, %v798
    %v825 = vpop.permute.xlu0 %824
    %828 = vset.pattern.permute.xlu0 0
    %829 = vperm.xlu0 %828, %v799
    %v830 = vpop.permute.xlu0 %829
    %833 = vset.pattern.permute.xlu0 0
    %834 = vperm.xlu0 %833, %v800
    %v835 = vpop.permute.xlu0 %834
    %838 = vset.pattern.permute.xlu0 0
    %839 = vperm.xlu0 %838, %v801
    %v840 = vpop.permute.xlu0 %839
    %843 = vset.pattern.permute.xlu0 0
    %844 = vperm.xlu0 %843, %v802
    %v845 = vpop.permute.xlu0 %844
    %848 = vset.pattern.permute.xlu0 0
    %849 = vperm.xlu0 %848, %v803
    %v850 = vpop.permute.xlu0 %849
    %853 = vset.pattern.permute.xlu0 0
    %854 = vperm.xlu0 %853, %v804
    %v855 = vpop.permute.xlu0 %854
    %858 = vset.pattern.permute.xlu0 0
    %859 = vperm.xlu0 %858, %v805
    %v860 = vpop.permute.xlu0 %859
    %863 = vset.pattern.permute.xlu0 0
    %864 = vperm.xlu0 %863, %v806
    %v865 = vpop.permute.xlu0 %864
    %868 = vset.pattern.permute.xlu0 0
    %869 = vperm.xlu0 %868, %v807
    %v870 = vpop.permute.xlu0 %869
    %873 = vset.pattern.permute.xlu0 0
    %874 = vperm.xlu0 %873, %v808
    %v875 = vpop.permute.xlu0 %874
    %878 = vset.pattern.permute.xlu0 0
    %879 = vperm.xlu0 %878, %v809
    %v880 = vpop.permute.xlu0 %879
    %883 = vset.pattern.permute.xlu0 0
    %884 = vperm.xlu0 %883, %v810
    %v885 = vpop.permute.xlu0 %884
    %888 = vset.pattern.permute.xlu0 0
    %889 = vperm.xlu0 %888, %v811
    %v890 = vpop.permute.xlu0 %889
    %v892 = vmul.f32 %v718, %v815
    %v893 = vmul.f32 %v723, %v820
    %v894 = vmul.f32 %v728, %v825
    %v895 = vmul.f32 %v733, %v830
    %v896 = vmul.f32 %v738, %v835
    %v897 = vmul.f32 %v743, %v840
    %v898 = vmul.f32 %v748, %v845
    %v899 = vmul.f32 %v753, %v850
    %v900 = vmul.f32 %v758, %v855
    %v901 = vmul.f32 %v763, %v860
    %v902 = vmul.f32 %v768, %v865
    %v903 = vmul.f32 %v773, %v870
    %v904 = vmul.f32 %v778, %v875
    %v905 = vmul.f32 %v783, %v880
    %v906 = vmul.f32 %v788, %v885
    %v907 = vmul.f32 %v793, %v890
    %v908 = vpack.c.bf16 %v893, %v892
    %v909 = vpack.c.bf16 %v895, %v894
    %v910 = vpack.c.bf16 %v897, %v896
    %v911 = vpack.c.bf16 %v899, %v898
    %v912 = vpack.c.bf16 %v901, %v900
    %v913 = vpack.c.bf16 %v903, %v902
    %v914 = vpack.c.bf16 %v905, %v904
    %v915 = vpack.c.bf16 %v907, %v906
    %v924 = vunpack.c.l.b16 %v908
    %v925 = vunpack.c.h.b16 %v908
    %v926 = vunpack.c.l.b16 %v909
    %v927 = vunpack.c.h.b16 %v909
    %v928 = vunpack.c.l.b16 %v910
    %v929 = vunpack.c.h.b16 %v910
    %v930 = vunpack.c.l.b16 %v911
    %v931 = vunpack.c.h.b16 %v911
    %v932 = vunpack.c.l.b16 %v912
    %v933 = vunpack.c.h.b16 %v912
    %v934 = vunpack.c.l.b16 %v913
    %v935 = vunpack.c.h.b16 %v913
    %v936 = vunpack.c.l.b16 %v914
    %v937 = vunpack.c.h.b16 %v914
    %v938 = vunpack.c.l.b16 %v915
    %v939 = vunpack.c.h.b16 %v915
    %v940 = vpack.c.b16 %v924, %v924
    %v941 = vpack.c.b16 %v925, %v925
    %v942 = vpack.c.b16 %v926, %v926
    %v943 = vpack.c.b16 %v927, %v927
    %v944 = vpack.c.b16 %v928, %v928
    %v945 = vpack.c.b16 %v929, %v929
    %v946 = vpack.c.b16 %v930, %v930
    %v947 = vpack.c.b16 %v931, %v931
    %v948 = vpack.c.b16 %v932, %v932
    %v949 = vpack.c.b16 %v933, %v933
    %v950 = vpack.c.b16 %v934, %v934
    %v951 = vpack.c.b16 %v935, %v935
    %v952 = vpack.c.b16 %v936, %v936
    %v953 = vpack.c.b16 %v937, %v937
    %v954 = vpack.c.b16 %v938, %v938
    %v955 = vpack.c.b16 %v939, %v939
    %972 = vst [vmem:[%s7] sm:$0xf] %v940
    %973 = vst [vmem:[%s7 + $0x4] sm:$0xf] %v941
    %974 = vst [vmem:[%s7 + $0x8] sm:$0xf] %v942
    %975 = vst [vmem:[%s7 + $0xc] sm:$0xf] %v943
    %976 = vst [vmem:[%s7 + $0x10] sm:$0xf] %v944
    %977 = vst [vmem:[%s7 + $0x14] sm:$0xf] %v945
    %978 = vst [vmem:[%s7 + $0x18] sm:$0xf] %v946
    %979 = vst [vmem:[%s7 + $0x1c] sm:$0xf] %v947
    %980 = vst [vmem:[%s7 + $0x20] sm:$0xf] %v948
    %981 = vst [vmem:[%s7 + $0x24] sm:$0xf] %v949
    %982 = vst [vmem:[%s7 + $0x28] sm:$0xf] %v950
    %983 = vst [vmem:[%s7 + $0x2c] sm:$0xf] %v951
    %984 = vst [vmem:[%s7 + $0x30] sm:$0xf] %v952
    %985 = vst [vmem:[%s7 + $0x34] sm:$0xf] %v953
    %986 = vst [vmem:[%s7 + $0x38] sm:$0xf] %v954
    %987 = vst [vmem:[%s7 + $0x3c] sm:$0xf] %v955
  $region37: #{gcn_forward.2} parent=0 // pred_fallthru
    _
  // Predicated region
  $region38: #{gcn_forward.2} parent=0 // pred_check
    _
  $region39: #{gcn_forward.2} parent=0 // pred_check_branch
    %989 = sbr.rel (0) target = $region41
  $region40: #{gcn_forward.2} parent=0 // pred_region
    _
  $region41: #{gcn_forward.2} parent=0 // pred_fallthru
    _
  // Predicated region
  $region42: #{gcn_forward.2} parent=0 // pred_check
    _
  $region43: #{gcn_forward.2} parent=0 // pred_check_branch
    %991 = sbr.rel (0) target = $region45
  $region44: #{gcn_forward.2} parent=0 // pred_region
    _
  $region45: #{gcn_forward.2} parent=0 // pred_fallthru
    _

</llo_original>
